<compile_context>
chip_gen: v7x
topology: tpu7x:2x2x1
jax: 0.10.0
libtpu: 0.0.40
codegen_flags: <defaults>
</compile_context>

<pallas_src>
import functools

import jax
import jax.numpy as jnp
from jax.experimental import pallas as pl
from jax.experimental.pallas import tpu as pltpu


def _conv_taps_kernel(x_ref, w_ref, b_ref, o_ref, *, offsets, width):
    """Direct conv for one batch element via KH*KW shifted matmuls.

    x_ref: (1, Cin, L)        flattened, reflect-padded, tail-padded image
    w_ref: (KH*KW, Cout, Cin) per-tap weight matrices
    b_ref: (Cout, 1)
    o_ref: (1, Cout, width)   width = OH1 * Wp (stride-1 output incl. invalid cols)
    """
    x_all = x_ref[0]      # (Cin, L)
    w_all = w_ref[...]    # (KK, Cout, Cin)
    cout = o_ref.shape[1]
    acc = jnp.zeros((cout, width), jnp.float32)
    for k, off in enumerate(offsets):          # static unroll over KH*KW taps
        xs = x_all[:, off:off + width]         # (Cin, width) static shifted window
        acc = acc + jnp.dot(w_all[k], xs, preferred_element_type=jnp.float32)
    o_ref[0] = (acc + b_ref[...]).astype(o_ref.dtype)


def _pallas_conv_core(x_flat, w_taps, bias2d, *, offsets, width):
    """x_flat: (N, Cin, L) f32, w_taps: (KK, Cout, Cin) f32, bias2d: (Cout, 1) f32."""
    N, Cin, L = x_flat.shape
    KK, Cout, _ = w_taps.shape

    kernel = functools.partial(_conv_taps_kernel, offsets=offsets, width=width)
    return pl.pallas_call(
        kernel,
        out_shape=jax.ShapeDtypeStruct((N, Cout, width), jnp.float32),
        grid_spec=pltpu.PrefetchScalarGridSpec(
            num_scalar_prefetch=0,
            grid=(N,),
            in_specs=[
                pl.BlockSpec((1, Cin, L), lambda n: (n, 0, 0)),
                pl.BlockSpec((KK, Cout, Cin), lambda n: (0, 0, 0)),
                pl.BlockSpec((Cout, 1), lambda n: (0, 0)),
            ],
            out_specs=pl.BlockSpec((1, Cout, width), lambda n: (n, 0, 0)),
        ),
        compiler_params=pltpu.CompilerParams(
            dimension_semantics=("parallel",),
        ),
    )(x_flat, w_taps, bias2d)


def conv2d_forward(x, weight, bias, *, kernel_size=3, stride=1, upsample=None):
    """Matches PyTorch: [Upsample(nearest)] -> [ReflectionPad2d(k//2)] -> Conv2d(k, stride).

    x:      (N, Cin, H, W)  float32
    weight: (Cout, Cin, KH, KW)
    bias:   (Cout,)
    returns (N, Cout, OH, OW)
    """
    N, Cin, H, W = x.shape
    Cout, _, KH, KW = weight.shape

    if upsample:
        # TODO(synk): fold nearest-neighbor replication into the kernel's window
        # index math instead of materializing the repeated tensor in HBM.
        x = jnp.repeat(jnp.repeat(x, upsample, axis=2), upsample, axis=3)

    if kernel_size > 1:
        p = kernel_size // 2
        assert x.shape[2] > p and x.shape[3] > p, "ReflectionPad2d needs H, W > k//2"
        x = jnp.pad(x, ((0, 0), (0, 0), (p, p), (p, p)), mode="reflect")
    Hp, Wp = x.shape[2], x.shape[3]

    OH1 = Hp - KH + 1          # stride-1 output height
    OW1 = Wp - KW + 1          # stride-1 output width
    width = OH1 * Wp           # kernel computes on the padded-column flat grid

    # Flatten spatial dims; pad the tail by KW-1 so every tap's shifted window of
    # length `width` is in-bounds (extra reads only feed invalid output columns,
    # which are sliced away below).
    x_flat = x.reshape(N, Cin, Hp * Wp).astype(jnp.float32)
    if KW > 1:
        x_flat = jnp.pad(x_flat, ((0, 0), (0, 0), (0, KW - 1)))

    offsets = tuple(kh * Wp + kw for kh in range(KH) for kw in range(KW))
    w_taps = (
        weight.transpose(2, 3, 0, 1).reshape(KH * KW, Cout, Cin).astype(jnp.float32)
    )
    bias2d = bias.reshape(Cout, 1).astype(jnp.float32)

    out_flat = _pallas_conv_core(x_flat, w_taps, bias2d, offsets=offsets, width=width)

    # (N, Cout, OH1, Wp): drop invalid columns, apply stride, back to NCHW sizes.
    out = out_flat.reshape(N, Cout, OH1, Wp)[:, :, ::stride, :OW1:stride]
    return out


if __name__ == "__main__":
    # Module config: Conv2d(in_channels=4, out_channels=8, kernel_size=3, stride=1, upsample=None)
    in_channels, out_channels, kernel_size, stride, upsample = 4, 8, 3, 1, None

    key = jax.random.PRNGKey(0)
    kx, kw, kb = jax.random.split(key, 3)

    fan_in = in_channels * kernel_size * kernel_size
    bound = 1.0 / (fan_in ** 0.5)
    weight = jax.random.uniform(
        kw, (out_channels, in_channels, kernel_size, kernel_size),
        minval=-bound, maxval=bound, dtype=jnp.float32)
    bias = jax.random.uniform(
        kb, (out_channels,), minval=-bound, maxval=bound, dtype=jnp.float32)

    x = jax.random.normal(kx, (2, in_channels, 16, 16), dtype=jnp.float32)

    fwd = jax.jit(functools.partial(
        conv2d_forward, kernel_size=kernel_size, stride=stride, upsample=upsample))
    out = fwd(x, weight, bias)
    out = jax.block_until_ready(out)

    # Reference check against XLA conv (reflection pad done identically).
    p = kernel_size // 2
    x_pad = jnp.pad(x, ((0, 0), (0, 0), (p, p), (p, p)), mode="reflect")
    ref = jax.lax.conv_general_dilated(
        x_pad, weight, window_strides=(stride, stride), padding="VALID",
        dimension_numbers=("NCHW", "OIHW", "NCHW")) + bias.reshape(1, -1, 1, 1)

    assert out.shape == (2, out_channels, 16, 16), out.shape
    err = float(jnp.max(jnp.abs(out - ref)))
    assert jnp.allclose(out, ref, rtol=1e-4, atol=1e-4), err

    print("KERNEL_OK")
</pallas_src>

<mosaic_0001>
module attributes {stable_mosaic.version = 11 : i64} {
  func.func @_conv_taps_kernel(%arg0: i32, %arg1: memref<1x4x326xf32, #tpu.memory_space<vmem>>, %arg2: memref<9x8x4xf32, #tpu.memory_space<vmem>>, %arg3: memref<8x1xf32, #tpu.memory_space<vmem>>, %arg4: memref<1x8x288xf32, #tpu.memory_space<vmem>>) attributes {dimension_semantics = [#tpu.dimension_semantics<parallel>], iteration_bounds = array<i64: 2>, scalar_prefetch = 0 : i64, scratch_operands = 0 : i64, tpu.core_type = #tpu.core_type<tc>, window_params = [{transform_indices = @transform_0, window_bounds = array<i64: 1, 4, 326>}, {pipeline_mode = #tpu.pipeline_mode<synchronous>, transform_indices = @transform_1, window_bounds = array<i64: 9, 8, 4>}, {pipeline_mode = #tpu.pipeline_mode<synchronous>, transform_indices = @transform_2, window_bounds = array<i64: 8, 1>}, {transform_indices = @transform_3, window_bounds = array<i64: 1, 8, 288>}]} {
    %c0 = arith.constant 0 : index
    %c0_0 = arith.constant 0 : index
    %c0_1 = arith.constant 0 : index
    %0 = vector.load %arg1[%c0, %c0_0, %c0_1] : memref<1x4x326xf32, #tpu.memory_space<vmem>>, vector<1x4x326xf32>
    %1 = vector.shape_cast %0 : vector<1x4x326xf32> to vector<4x326xf32>
    %c0_2 = arith.constant 0 : index
    %c0_3 = arith.constant 0 : index
    %c0_4 = arith.constant 0 : index
    %2 = vector.load %arg2[%c0_2, %c0_3, %c0_4] : memref<9x8x4xf32, #tpu.memory_space<vmem>>, vector<9x8x4xf32>
    %cst = arith.constant 0.000000e+00 : f32
    %3 = vector.broadcast %cst : f32 to vector<8x288xf32>
    %4 = vector.extract_strided_slice %1 {offsets = [0, 0], sizes = [4, 288], strides = [1, 1]} : vector<4x326xf32> to vector<4x288xf32>
    %5 = vector.extract_strided_slice %2 {offsets = [0, 0, 0], sizes = [1, 8, 4], strides = [1, 1, 1]} : vector<9x8x4xf32> to vector<1x8x4xf32>
    %6 = vector.shape_cast %5 : vector<1x8x4xf32> to vector<8x4xf32>
    %cst_5 = arith.constant dense<0.000000e+00> : vector<8x288xf32>
    %7 = tpu.matmul %6, %4, %cst_5 {dimension_numbers = #tpu.dot_dimension_numbers<[1], [0], [0], [1], [0, 0, 1, 1], [], []>} : vector<8x4xf32>, vector<4x288xf32>, vector<8x288xf32> -> vector<8x288xf32>
    %8 = arith.addf %3, %7 : vector<8x288xf32>
    %9 = vector.extract_strided_slice %1 {offsets = [0, 1], sizes = [4, 288], strides = [1, 1]} : vector<4x326xf32> to vector<4x288xf32>
    %10 = vector.extract_strided_slice %2 {offsets = [1, 0, 0], sizes = [1, 8, 4], strides = [1, 1, 1]} : vector<9x8x4xf32> to vector<1x8x4xf32>
    %11 = vector.shape_cast %10 : vector<1x8x4xf32> to vector<8x4xf32>
    %cst_6 = arith.constant dense<0.000000e+00> : vector<8x288xf32>
    %12 = tpu.matmul %11, %9, %cst_6 {dimension_numbers = #tpu.dot_dimension_numbers<[1], [0], [0], [1], [0, 0, 1, 1], [], []>} : vector<8x4xf32>, vector<4x288xf32>, vector<8x288xf32> -> vector<8x288xf32>
    %13 = arith.addf %8, %12 : vector<8x288xf32>
    %14 = vector.extract_strided_slice %1 {offsets = [0, 2], sizes = [4, 288], strides = [1, 1]} : vector<4x326xf32> to vector<4x288xf32>
    %15 = vector.extract_strided_slice %2 {offsets = [2, 0, 0], sizes = [1, 8, 4], strides = [1, 1, 1]} : vector<9x8x4xf32> to vector<1x8x4xf32>
    %16 = vector.shape_cast %15 : vector<1x8x4xf32> to vector<8x4xf32>
    %cst_7 = arith.constant dense<0.000000e+00> : vector<8x288xf32>
    %17 = tpu.matmul %16, %14, %cst_7 {dimension_numbers = #tpu.dot_dimension_numbers<[1], [0], [0], [1], [0, 0, 1, 1], [], []>} : vector<8x4xf32>, vector<4x288xf32>, vector<8x288xf32> -> vector<8x288xf32>
    %18 = arith.addf %13, %17 : vector<8x288xf32>
    %19 = vector.extract_strided_slice %1 {offsets = [0, 18], sizes = [4, 288], strides = [1, 1]} : vector<4x326xf32> to vector<4x288xf32>
    %20 = vector.extract_strided_slice %2 {offsets = [3, 0, 0], sizes = [1, 8, 4], strides = [1, 1, 1]} : vector<9x8x4xf32> to vector<1x8x4xf32>
    %21 = vector.shape_cast %20 : vector<1x8x4xf32> to vector<8x4xf32>
    %cst_8 = arith.constant dense<0.000000e+00> : vector<8x288xf32>
    %22 = tpu.matmul %21, %19, %cst_8 {dimension_numbers = #tpu.dot_dimension_numbers<[1], [0], [0], [1], [0, 0, 1, 1], [], []>} : vector<8x4xf32>, vector<4x288xf32>, vector<8x288xf32> -> vector<8x288xf32>
    %23 = arith.addf %18, %22 : vector<8x288xf32>
    %24 = vector.extract_strided_slice %1 {offsets = [0, 19], sizes = [4, 288], strides = [1, 1]} : vector<4x326xf32> to vector<4x288xf32>
    %25 = vector.extract_strided_slice %2 {offsets = [4, 0, 0], sizes = [1, 8, 4], strides = [1, 1, 1]} : vector<9x8x4xf32> to vector<1x8x4xf32>
    %26 = vector.shape_cast %25 : vector<1x8x4xf32> to vector<8x4xf32>
    %cst_9 = arith.constant dense<0.000000e+00> : vector<8x288xf32>
    %27 = tpu.matmul %26, %24, %cst_9 {dimension_numbers = #tpu.dot_dimension_numbers<[1], [0], [0], [1], [0, 0, 1, 1], [], []>} : vector<8x4xf32>, vector<4x288xf32>, vector<8x288xf32> -> vector<8x288xf32>
    %28 = arith.addf %23, %27 : vector<8x288xf32>
    %29 = vector.extract_strided_slice %1 {offsets = [0, 20], sizes = [4, 288], strides = [1, 1]} : vector<4x326xf32> to vector<4x288xf32>
    %30 = vector.extract_strided_slice %2 {offsets = [5, 0, 0], sizes = [1, 8, 4], strides = [1, 1, 1]} : vector<9x8x4xf32> to vector<1x8x4xf32>
    %31 = vector.shape_cast %30 : vector<1x8x4xf32> to vector<8x4xf32>
    %cst_10 = arith.constant dense<0.000000e+00> : vector<8x288xf32>
    %32 = tpu.matmul %31, %29, %cst_10 {dimension_numbers = #tpu.dot_dimension_numbers<[1], [0], [0], [1], [0, 0, 1, 1], [], []>} : vector<8x4xf32>, vector<4x288xf32>, vector<8x288xf32> -> vector<8x288xf32>
    %33 = arith.addf %28, %32 : vector<8x288xf32>
    %34 = vector.extract_strided_slice %1 {offsets = [0, 36], sizes = [4, 288], strides = [1, 1]} : vector<4x326xf32> to vector<4x288xf32>
    %35 = vector.extract_strided_slice %2 {offsets = [6, 0, 0], sizes = [1, 8, 4], strides = [1, 1, 1]} : vector<9x8x4xf32> to vector<1x8x4xf32>
    %36 = vector.shape_cast %35 : vector<1x8x4xf32> to vector<8x4xf32>
    %cst_11 = arith.constant dense<0.000000e+00> : vector<8x288xf32>
    %37 = tpu.matmul %36, %34, %cst_11 {dimension_numbers = #tpu.dot_dimension_numbers<[1], [0], [0], [1], [0, 0, 1, 1], [], []>} : vector<8x4xf32>, vector<4x288xf32>, vector<8x288xf32> -> vector<8x288xf32>
    %38 = arith.addf %33, %37 : vector<8x288xf32>
    %39 = vector.extract_strided_slice %1 {offsets = [0, 37], sizes = [4, 288], strides = [1, 1]} : vector<4x326xf32> to vector<4x288xf32>
    %40 = vector.extract_strided_slice %2 {offsets = [7, 0, 0], sizes = [1, 8, 4], strides = [1, 1, 1]} : vector<9x8x4xf32> to vector<1x8x4xf32>
    %41 = vector.shape_cast %40 : vector<1x8x4xf32> to vector<8x4xf32>
    %cst_12 = arith.constant dense<0.000000e+00> : vector<8x288xf32>
    %42 = tpu.matmul %41, %39, %cst_12 {dimension_numbers = #tpu.dot_dimension_numbers<[1], [0], [0], [1], [0, 0, 1, 1], [], []>} : vector<8x4xf32>, vector<4x288xf32>, vector<8x288xf32> -> vector<8x288xf32>
    %43 = arith.addf %38, %42 : vector<8x288xf32>
    %44 = vector.extract_strided_slice %1 {offsets = [0, 38], sizes = [4, 288], strides = [1, 1]} : vector<4x326xf32> to vector<4x288xf32>
    %45 = vector.extract_strided_slice %2 {offsets = [8, 0, 0], sizes = [1, 8, 4], strides = [1, 1, 1]} : vector<9x8x4xf32> to vector<1x8x4xf32>
    %46 = vector.shape_cast %45 : vector<1x8x4xf32> to vector<8x4xf32>
    %cst_13 = arith.constant dense<0.000000e+00> : vector<8x288xf32>
    %47 = tpu.matmul %46, %44, %cst_13 {dimension_numbers = #tpu.dot_dimension_numbers<[1], [0], [0], [1], [0, 0, 1, 1], [], []>} : vector<8x4xf32>, vector<4x288xf32>, vector<8x288xf32> -> vector<8x288xf32>
    %48 = arith.addf %43, %47 : vector<8x288xf32>
    %c0_14 = arith.constant 0 : index
    %c0_15 = arith.constant 0 : index
    %49 = vector.load %arg3[%c0_14, %c0_15] : memref<8x1xf32, #tpu.memory_space<vmem>>, vector<8x1xf32>
    %50 = vector.broadcast %49 : vector<8x1xf32> to vector<8x288xf32>
    %51 = arith.addf %48, %50 : vector<8x288xf32>
    %c0_16 = arith.constant 0 : index
    %c0_17 = arith.constant 0 : index
    %c0_18 = arith.constant 0 : index
    %52 = vector.load %arg4[%c0_16, %c0_17, %c0_18] : memref<1x8x288xf32, #tpu.memory_space<vmem>>, vector<1x8x288xf32>
    %53 = vector.shape_cast %52 : vector<1x8x288xf32> to vector<8x288xf32>
    %54 = vector.shape_cast %51 : vector<8x288xf32> to vector<1x8x288xf32>
    tpu.vector_store %arg4[%c0_16, %c0_17, %c0_18], %54 {strides = array<i32>} : memref<1x8x288xf32, #tpu.memory_space<vmem>>, vector<1x8x288xf32>,
    return
  }
  func.func @transform_0(%arg0: i32) -> (i32, i32, i32) {
    %c0_i32 = arith.constant 0 : i32
    %c0_i32_0 = arith.constant 0 : i32
    %c0_i32_1 = arith.constant 0 : i32
    return %arg0, %c0_i32, %c0_i32_0 : i32, i32, i32
  }
  func.func @transform_1(%arg0: i32) -> (i32, i32, i32) {
    %c0_i32 = arith.constant 0 : i32
    %c0_i32_0 = arith.constant 0 : i32
    %c0_i32_1 = arith.constant 0 : i32
    %c0_i32_2 = arith.constant 0 : i32
    return %c0_i32, %c0_i32_0, %c0_i32_1 : i32, i32, i32
  }
  func.func @transform_2(%arg0: i32) -> (i32, i32) {
    %c0_i32 = arith.constant 0 : i32
    %c0_i32_0 = arith.constant 0 : i32
    %c0_i32_1 = arith.constant 0 : i32
    return %c0_i32, %c0_i32_0 : i32, i32
  }
  func.func @transform_3(%arg0: i32) -> (i32, i32, i32) {
    %c0_i32 = arith.constant 0 : i32
    %c0_i32_0 = arith.constant 0 : i32
    %c0_i32_1 = arith.constant 0 : i32
    return %arg0, %c0_i32, %c0_i32_0 : i32, i32, i32
  }
}

</mosaic_0001>

<llo_original>
// kernel: conv2d_forward.1
$region0: #{conv2d_forward.1}
  #allocation0 [shape = 'u32[]', space=smem, size = 0x4, offset = 0x4, fixed_abs, tag = 'smem constant byte address 0x4 - core index']
  #allocation1 [shape = 'u32[144,128]{1,0:T(1,128)}', space=vmem, size = 0x12000, scoped, tag = 'internal scratch']
  %s0 = inlined_call_operand.vmem [shape: f32[2,4,326], index: 0, kind: input, shape index: {}]
  %s1 = inlined_call_operand.vmem [shape: f32[9,8,4], index: 1, kind: input, shape index: {}]
  %s2 = inlined_call_operand.vmem [shape: f32[8,1], index: 2, kind: input, shape index: {}]
  %s3 = inlined_call_operand.vmem [shape: f32[2,8,288], index: 3, kind: output, shape index: {}]
  %s4 = sld [smem:[#allocation0]]
  $region45: #{conv2d_forward.1} parent=0
    _
  %s6 = ssub.s32 1, %s4
  %s7 = scalar_select 0, %s6, %s4
  loop: start=0, step=1, limit=4
  $region2: #{conv2d_forward.1} parent=0 // loop_pre_header
    _
  $region3: #{conv2d_forward.1} parent=0 // loop_header
    %s9 = sphi 0, %s13
    %p10 = scmp.ge.s32.totalorder %s9, 4
    %s19 = sphi 0, %s21
    %s22 = sphi 0, %s19
    %s23 = sphi 0, %s22
    %s39 = sphi 0, %s23
    %s43 = sphi 0, %s43
    %s45 = sphi 0, %s43
    %s46 = sphi 0, %s45
    %s60 = sphi 0, %s46
    %s64 = sphi 0, %s64
    %s66 = sphi 0, %s64
    %s67 = sphi 0, %s66
    %s81 = sphi 0, %s67
    %s87 = sphi 0, %s89
    %s90 = sphi 0, %s87
    %s91 = sphi 0, %s90
    %s107 = sphi 0, %s91
  $region4: #{conv2d_forward.1} parent=0 // loop_header_branch
    %12 = sbr.rel (%p10) target = $region8
  $region5: #{conv2d_forward.1} parent=0 // loop_body
    %s14 = ssub.s32 %s9, 1
    %s15 = ssub.s32 %s9, 2
    %s16 = sadd.s32 %s9, 1
    %s17 = ssub.s32 %s9, %s16
    %p18 = scmp.eq.s32.totalorder %s17, 0
    %s20 = sadd.s32 %s19, 1
    %s21 = scalar_select %p18, %s19, %s20
    %p24 = pneg %p18
    %p25 = scmp.eq.s32.totalorder %s9, 1
    %p26 = por %p24, %p25
    %p27 = scmp.ne.s32.totalorder %s19, %s22
    %p28 = scmp.eq.s32.totalorder %s9, 0
    %p29 = por %p27, %p28
    %p30 = scmp.ne.s32.totalorder %s19, %s22
    %p31 = scmp.eq.s32.totalorder %s14, 1
    %p32 = por %p30, %p31
    %p33 = scmp.ne.s32.totalorder %s22, %s23
    %p34 = scmp.eq.s32.totalorder %s14, 0
    %p35 = por %p33, %p34
    %p36 = scmp.ne.s32.totalorder %s22, %s23
    %p37 = scmp.eq.s32.totalorder %s15, 1
    %p38 = por %p36, %p37
    %p40 = scmp.ne.s32.totalorder %s23, %s39
    %p41 = scmp.eq.s32.totalorder %s15, 0
    %p42 = por %p40, %p41
    %s44 = sadd.s32 %s43, 1
    %p47 = scmp.eq.s32.totalorder %s9, 1
    %p48 = scmp.ne.s32.totalorder %s43, %s45
    %p49 = scmp.eq.s32.totalorder %s9, 0
    %p50 = por %p48, %p49
    %p51 = scmp.ne.s32.totalorder %s43, %s45
    %p52 = scmp.eq.s32.totalorder %s14, 1
    %p53 = por %p51, %p52
    %p54 = scmp.ne.s32.totalorder %s45, %s46
    %p55 = scmp.eq.s32.totalorder %s14, 0
    %p56 = por %p54, %p55
    %p57 = scmp.ne.s32.totalorder %s45, %s46
    %p58 = scmp.eq.s32.totalorder %s15, 1
    %p59 = por %p57, %p58
    %p61 = scmp.ne.s32.totalorder %s46, %s60
    %p62 = scmp.eq.s32.totalorder %s15, 0
    %p63 = por %p61, %p62
    %s65 = sadd.s32 %s64, 1
    %p68 = scmp.eq.s32.totalorder %s9, 1
    %p69 = scmp.ne.s32.totalorder %s64, %s66
    %p70 = scmp.eq.s32.totalorder %s9, 0
    %p71 = por %p69, %p70
    %p72 = scmp.ne.s32.totalorder %s64, %s66
    %p73 = scmp.eq.s32.totalorder %s14, 1
    %p74 = por %p72, %p73
    %p75 = scmp.ne.s32.totalorder %s66, %s67
    %p76 = scmp.eq.s32.totalorder %s14, 0
    %p77 = por %p75, %p76
    %p78 = scmp.ne.s32.totalorder %s66, %s67
    %p79 = scmp.eq.s32.totalorder %s15, 1
    %p80 = por %p78, %p79
    %p82 = scmp.ne.s32.totalorder %s67, %s81
    %p83 = scmp.eq.s32.totalorder %s15, 0
    %p84 = por %p82, %p83
    %s85 = ssub.s32 %s9, %s16
    %p86 = scmp.eq.s32.totalorder %s85, 0
    %s88 = sadd.s32 %s87, 1
    %s89 = scalar_select %p86, %s87, %s88
    %p92 = pneg %p86
    %p93 = scmp.eq.s32.totalorder %s9, 1
    %p94 = por %p92, %p93
    %p95 = scmp.ne.s32.totalorder %s87, %s90
    %p96 = scmp.eq.s32.totalorder %s9, 0
    %p97 = por %p95, %p96
    %p98 = scmp.ne.s32.totalorder %s87, %s90
    %p99 = scmp.eq.s32.totalorder %s14, 1
    %p100 = por %p98, %p99
    %p101 = scmp.ne.s32.totalorder %s90, %s91
    %p102 = scmp.eq.s32.totalorder %s14, 0
    %p103 = por %p101, %p102
    %p104 = scmp.ne.s32.totalorder %s90, %s91
    %p105 = scmp.eq.s32.totalorder %s15, 1
    %p106 = por %p104, %p105
    %p108 = scmp.ne.s32.totalorder %s91, %s107
    %p109 = scmp.eq.s32.totalorder %s15, 0
    %p110 = por %p108, %p109
    %p111 = scmp.le.s32.totalorder 1, %s9
    %p112 = scmp.lt.s32.totalorder %s9, 3
    %p113 = pnand %p111, %p112
    %p114 = pneg %p113
    // Predicated region
    $region9: #{conv2d_forward.1} parent=5 // pred_check
      _
    $region10: #{conv2d_forward.1} parent=5 // pred_check_branch
      %116 = sbr.rel (%p113) target = $region12
    $region11: #{conv2d_forward.1} parent=5 // pred_region
      %s117 = ssub.s32 %s9, 1
      // Predicated region
      $region13: #{conv2d_forward.1} parent=11 // pred_check
        %p118 = pneg %p56
      $region14: #{conv2d_forward.1} parent=11 // pred_check_branch
        %120 = sbr.rel (%p118) target = $region16
      $region15: #{conv2d_forward.1} parent=11 // pred_region
        _
      $region16: #{conv2d_forward.1} parent=11 // pred_fallthru
        _
      // Predicated region
      $region17: #{conv2d_forward.1} parent=11 // pred_check
        %p121 = pneg %p77
      $region18: #{conv2d_forward.1} parent=11 // pred_check_branch
        %123 = sbr.rel (%p121) target = $region20
      $region19: #{conv2d_forward.1} parent=11 // pred_region
        _
      $region20: #{conv2d_forward.1} parent=11 // pred_fallthru
        _
    $region12: #{conv2d_forward.1} parent=5 // pred_fallthru
      _
    %p124 = scmp.lt.s32.totalorder %s9, 2
    // Predicated region
    $region21: #{conv2d_forward.1} parent=5 // pred_check
      %p125 = pneg %p124
    $region22: #{conv2d_forward.1} parent=5 // pred_check_branch
      %127 = sbr.rel (%p125) target = $region24
    $region23: #{conv2d_forward.1} parent=5 // pred_region
      // Predicated region
      $region25: #{conv2d_forward.1} parent=23 // pred_check
        %p128 = pneg %p29
      $region26: #{conv2d_forward.1} parent=23 // pred_check_branch
        %130 = sbr.rel (%p128) target = $region28
      $region27: #{conv2d_forward.1} parent=23 // pred_region
        %p131 = scmp.lt.s32.totalorder %s9, 1
        %s132 = scalar_select %p131, %s9, 1
        %s133 = smul.addr %s132, 3
        %s134 = smul.addr %s133, 4
        %s135 = scalar_lea.vmem %s0, %s134
      $region28: #{conv2d_forward.1} parent=23 // pred_fallthru
        _
    $region24: #{conv2d_forward.1} parent=5 // pred_fallthru
      _
    %p136 = scmp.le.s32.totalorder 1, %s9
    %p137 = scmp.lt.s32.totalorder %s9, 3
    %p138 = pnand %p136, %p137
    %p139 = pneg %p138
    // Predicated region
    $region29: #{conv2d_forward.1} parent=5 // pred_check
      _
    $region30: #{conv2d_forward.1} parent=5 // pred_check_branch
      %141 = sbr.rel (%p138) target = $region32
    $region31: #{conv2d_forward.1} parent=5 // pred_region
      %s142 = ssub.s32 %s9, 1
      %p143 = scmp.lt.s32.totalorder %s14, 1
      %s144 = scalar_select %p143, %s14, 1
      %s145 = smul.addr %s144, 3
      %s146 = smul.addr %s145, 4
      %s147 = scalar_lea.vmem %s0, %s146
      %p148 = pneg %p35
      %p149 = pneg %p32
      %p150 = pneg %p56
      %p151 = pneg %p53
      %p152 = pneg %p77
      %p153 = pneg %p74
      %p154 = pneg %p103
      %p155 = pneg %p100
      %p156 = scmp.lt.s32.totalorder %s14, 1
      %s157 = scalar_select %p156, %s14, 1
      %s158 = smul.addr %s157, 3
      %s159 = smul.addr %s158, 8
      %s160 = scalar_lea.vmem %s3, %s159
      %p161 = scmp.lt.s32.totalorder %s14, 1
      %s162 = scalar_select %p161, %s14, 1
      %s163 = smul.addr %s162, 3
      %s164 = smul.addr %s163, 4
      %s165 = scalar_lea.vmem %s0, %s164
      %p166 = scmp.lt.s32.totalorder %s14, 1
      %s167 = scalar_select %p166, %s14, 1
      %s168 = smul.addr %s167, 3
      %s169 = smul.addr %s168, 8
      %s170 = scalar_lea.vmem %s3, %s169
      %v171 = vld [vmem:[%s165] sm:$0xff]
      %v172 = vld [vmem:[%s165 + $0x8] sm:$0xf]
      %v173 = vld [vmem:[%s1] sm:$0xff]
      %v174 = vld [vmem:[%s1 + $0x8] sm:$0xff]
      %v175 = vld [vmem:[%s1 + $0x10] sm:$0xff]
      %v176 = vld [vmem:[%s1 + $0x18] sm:$0xff]
      %v177 = vld [vmem:[%s1 + $0x20] sm:$0xff]
      %v178 = vld [vmem:[%s1 + $0x28] sm:$0xff]
      %v179 = vld [vmem:[%s1 + $0x30] sm:$0xff]
      %v180 = vld [vmem:[%s1 + $0x38] sm:$0xff]
      %v181 = vld [vmem:[%s1 + $0x40] sm:$0xff]
      %v184 = vcombine.high %v171, %v171
      %185 = vrot.lane.b32.xlu0 %v171, 127
      %v186 = vpop.permute.xlu0 %185
      %187 = vrot.lane.b32.xlu0 %v184, 127
      %v188 = vpop.permute.xlu0 %187
      %189 = vrot.lane.b32.xlu0 %v172, 127
      %v190 = vpop.permute.xlu0 %189
      %vm191 = vcmask 1039360
      %v192 = vsel %vm191, %v186, %v188
      %v193 = vsel %vm191, %v188, %v190
      %vm194 = vcmask 31744
      %v196 = vsel %vm194, %v174, 0
      %vm198 = vcmask 1043456
      %v199 = vsel %vm198, %v192, 0
      %v201 = vsel %vm198, %v193, 0
      %v203 = vsel %vm198, %v190, 0
      %205 = vmatprep.subr.mxu0 %v201
      %206 = vmatpush1.msra.mxu0 %v199
      %207 = vmatprep.subr.mxu0 0.0
      %208 = vmatpush1.msra.mxu0 0.0
      %209 = vmatprep.subr.mxu0 0.0
      %210 = vmatpush1.msra.mxu0 0.0
      %211 = vmatprep.subr.mxu0 0.0
      %212 = vmatpush1.msra.mxu0 0.0
      %213 = vmatprep.subr.mxu0 0.0
      %214 = vmatpush1.msra.mxu0 0.0
      %215 = vmatprep.subr.mxu0 0.0
      %216 = vmatpush1.msra.mxu0 0.0
      %217 = vmatprep.subr.mxu0 0.0
      %218 = vmatpush1.msra.mxu0 0.0
      %219 = vmatprep.subr.mxu0 0.0
      %220 = vmatpush1.msra.mxu0 0.0
      %221 = vmatprep.subr.mxu0 0.0
      %222 = vmatpush1.msra.mxu0 0.0
      %223 = vmatprep.subr.mxu0 0.0
      %224 = vmatpush1.msra.mxu0 0.0
      %225 = vmatprep.subr.mxu0 0.0
      %226 = vmatpush1.msra.mxu0 0.0
      %227 = vmatprep.subr.mxu0 0.0
      %228 = vmatpush1.msra.mxu0 0.0
      %229 = vmatprep.subr.mxu0 0.0
      %230 = vmatpush1.msra.mxu0 0.0
      %231 = vmatprep.subr.mxu0 0.0
      %232 = vmatpush1.msra.mxu0 0.0
      %233 = vmatprep.subr.mxu0 0.0
      %234 = vmatpush1.msra.mxu0 0.0
      %235 = vmatprep.subr.mxu0 0.0
      %236 = vmatpush1.msra.mxu0 0.0
      %237 = vmatprep.subr.mxu0 0.0
      %238 = vmatpush1.msra.mxu0 0.0
      %239 = vmatprep.subr.mxu0 0.0
      %240 = vmatpush1.msra.mxu0 0.0
      %241 = vmatprep.subr.mxu0 0.0
      %242 = vmatpush1.msra.mxu0 0.0
      %243 = vmatprep.subr.mxu0 0.0
      %244 = vmatpush1.msra.mxu0 0.0
      %245 = vmatprep.subr.mxu0 0.0
      %246 = vmatpush1.msra.mxu0 0.0
      %247 = vmatprep.subr.mxu0 0.0
      %248 = vmatpush1.msra.mxu0 0.0
      %249 = vmatprep.subr.mxu0 0.0
      %250 = vmatpush1.msra.mxu0 0.0
      %251 = vmatprep.subr.mxu0 0.0
      %252 = vmatpush1.msra.mxu0 0.0
      %253 = vmatprep.subr.mxu0 0.0
      %254 = vmatpush1.msra.mxu0 0.0
      %255 = vmatprep.subr.mxu0 0.0
      %256 = vmatpush1.msra.mxu0 0.0
      %257 = vmatprep.subr.mxu0 0.0
      %258 = vmatpush1.msra.mxu0 0.0
      %259 = vmatprep.subr.mxu0 0.0
      %260 = vmatpush1.msra.mxu0 0.0
      %261 = vmatprep.subr.mxu0 0.0
      %262 = vmatpush1.msra.mxu0 0.0
      %263 = vmatprep.subr.mxu0 0.0
      %264 = vmatpush1.msra.mxu0 0.0
      %265 = vmatprep.subr.mxu0 0.0
      %266 = vmatpush1.msra.mxu0 0.0
      %267 = vmatprep.subr.mxu0 0.0
      %268 = vmatpush1.msra.mxu0 0.0
      %269 = vmatprep.mubr.f32.mxu0 0.0
      %270 = vmatmul.mubr.f32.gmra.mrb[0].mxu0 %v196
      %v271 = vpop.f32.mrb[0].mxu0
      %v272 = vadd.f32 0.0, %v271
      %v273 = vpop.f32.mrb[0].mxu0
      %v274 = vadd.f32 0.0, %v273
      %275 = vdwg.mxu0
      %276 = vmatprep.subr.mxu0 0.0
      %277 = vmatpush1.msra.mxu0 %v203
      %278 = vmatprep.subr.mxu0 0.0
      %279 = vmatpush1.msra.mxu0 0.0
      %280 = vmatprep.subr.mxu0 0.0
      %281 = vmatpush1.msra.mxu0 0.0
      %282 = vmatprep.subr.mxu0 0.0
      %283 = vmatpush1.msra.mxu0 0.0
      %284 = vmatprep.subr.mxu0 0.0
      %285 = vmatpush1.msra.mxu0 0.0
      %286 = vmatprep.subr.mxu0 0.0
      %287 = vmatpush1.msra.mxu0 0.0
      %288 = vmatprep.subr.mxu0 0.0
      %289 = vmatpush1.msra.mxu0 0.0
      %290 = vmatprep.subr.mxu0 0.0
      %291 = vmatpush1.msra.mxu0 0.0
      %292 = vmatprep.subr.mxu0 0.0
      %293 = vmatpush1.msra.mxu0 0.0
      %294 = vmatprep.subr.mxu0 0.0
      %295 = vmatpush1.msra.mxu0 0.0
      %296 = vmatprep.subr.mxu0 0.0
      %297 = vmatpush1.msra.mxu0 0.0
      %298 = vmatprep.subr.mxu0 0.0
      %299 = vmatpush1.msra.mxu0 0.0
      %300 = vmatprep.subr.mxu0 0.0
      %301 = vmatpush1.msra.mxu0 0.0
      %302 = vmatprep.subr.mxu0 0.0
      %303 = vmatpush1.msra.mxu0 0.0
      %304 = vmatprep.subr.mxu0 0.0
      %305 = vmatpush1.msra.mxu0 0.0
      %306 = vmatprep.subr.mxu0 0.0
      %307 = vmatpush1.msra.mxu0 0.0
      %308 = vmatprep.subr.mxu0 0.0
      %309 = vmatpush1.msra.mxu0 0.0
      %310 = vmatprep.subr.mxu0 0.0
      %311 = vmatpush1.msra.mxu0 0.0
      %312 = vmatprep.subr.mxu0 0.0
      %313 = vmatpush1.msra.mxu0 0.0
      %314 = vmatprep.subr.mxu0 0.0
      %315 = vmatpush1.msra.mxu0 0.0
      %316 = vmatprep.subr.mxu0 0.0
      %317 = vmatpush1.msra.mxu0 0.0
      %318 = vmatprep.subr.mxu0 0.0
      %319 = vmatpush1.msra.mxu0 0.0
      %320 = vmatprep.subr.mxu0 0.0
      %321 = vmatpush1.msra.mxu0 0.0
      %322 = vmatprep.subr.mxu0 0.0
      %323 = vmatpush1.msra.mxu0 0.0
      %324 = vmatprep.subr.mxu0 0.0
      %325 = vmatpush1.msra.mxu0 0.0
      %326 = vmatprep.subr.mxu0 0.0
      %327 = vmatpush1.msra.mxu0 0.0
      %328 = vmatprep.subr.mxu0 0.0
      %329 = vmatpush1.msra.mxu0 0.0
      %330 = vmatprep.subr.mxu0 0.0
      %331 = vmatpush1.msra.mxu0 0.0
      %332 = vmatprep.subr.mxu0 0.0
      %333 = vmatpush1.msra.mxu0 0.0
      %334 = vmatprep.subr.mxu0 0.0
      %335 = vmatpush1.msra.mxu0 0.0
      %336 = vmatprep.subr.mxu0 0.0
      %337 = vmatpush1.msra.mxu0 0.0
      %338 = vmatprep.subr.mxu0 0.0
      %339 = vmatpush1.msra.mxu0 0.0
      %340 = vmatprep.mubr.f32.mxu0 0.0
      %341 = vmatmul.mubr.f32.gmra.mrb[0].mxu0 %v196
      %v342 = vpop.f32.mrb[0].mxu0
      %v343 = vadd.f32 0.0, %v342
      %v344 = vpop.f32.mrb[0].mxu0
      %345 = vdwg.mxu0
      %v347 = vsel %vm194, %v173, 0
      %v349 = vsel %vm198, %v171, 0
      %v351 = vsel %vm198, %v184, 0
      %v353 = vsel %vm198, %v172, 0
      %355 = vmatprep.subr.mxu0 %v351
      %356 = vmatpush1.msra.mxu0 %v349
      %357 = vmatprep.subr.mxu0 0.0
      %358 = vmatpush1.msra.mxu0 0.0
      %359 = vmatprep.subr.mxu0 0.0
      %360 = vmatpush1.msra.mxu0 0.0
      %361 = vmatprep.subr.mxu0 0.0
      %362 = vmatpush1.msra.mxu0 0.0
      %363 = vmatprep.subr.mxu0 0.0
      %364 = vmatpush1.msra.mxu0 0.0
      %365 = vmatprep.subr.mxu0 0.0
      %366 = vmatpush1.msra.mxu0 0.0
      %367 = vmatprep.subr.mxu0 0.0
      %368 = vmatpush1.msra.mxu0 0.0
      %369 = vmatprep.subr.mxu0 0.0
      %370 = vmatpush1.msra.mxu0 0.0
      %371 = vmatprep.subr.mxu0 0.0
      %372 = vmatpush1.msra.mxu0 0.0
      %373 = vmatprep.subr.mxu0 0.0
      %374 = vmatpush1.msra.mxu0 0.0
      %375 = vmatprep.subr.mxu0 0.0
      %376 = vmatpush1.msra.mxu0 0.0
      %377 = vmatprep.subr.mxu0 0.0
      %378 = vmatpush1.msra.mxu0 0.0
      %379 = vmatprep.subr.mxu0 0.0
      %380 = vmatpush1.msra.mxu0 0.0
      %381 = vmatprep.subr.mxu0 0.0
      %382 = vmatpush1.msra.mxu0 0.0
      %383 = vmatprep.subr.mxu0 0.0
      %384 = vmatpush1.msra.mxu0 0.0
      %385 = vmatprep.subr.mxu0 0.0
      %386 = vmatpush1.msra.mxu0 0.0
      %387 = vmatprep.subr.mxu0 0.0
      %388 = vmatpush1.msra.mxu0 0.0
      %389 = vmatprep.subr.mxu0 0.0
      %390 = vmatpush1.msra.mxu0 0.0
      %391 = vmatprep.subr.mxu0 0.0
      %392 = vmatpush1.msra.mxu0 0.0
      %393 = vmatprep.subr.mxu0 0.0
      %394 = vmatpush1.msra.mxu0 0.0
      %395 = vmatprep.subr.mxu0 0.0
      %396 = vmatpush1.msra.mxu0 0.0
      %397 = vmatprep.subr.mxu0 0.0
      %398 = vmatpush1.msra.mxu0 0.0
      %399 = vmatprep.subr.mxu0 0.0
      %400 = vmatpush1.msra.mxu0 0.0
      %401 = vmatprep.subr.mxu0 0.0
      %402 = vmatpush1.msra.mxu0 0.0
      %403 = vmatprep.subr.mxu0 0.0
      %404 = vmatpush1.msra.mxu0 0.0
      %405 = vmatprep.subr.mxu0 0.0
      %406 = vmatpush1.msra.mxu0 0.0
      %407 = vmatprep.subr.mxu0 0.0
      %408 = vmatpush1.msra.mxu0 0.0
      %409 = vmatprep.subr.mxu0 0.0
      %410 = vmatpush1.msra.mxu0 0.0
      %411 = vmatprep.subr.mxu0 0.0
      %412 = vmatpush1.msra.mxu0 0.0
      %413 = vmatprep.subr.mxu0 0.0
      %414 = vmatpush1.msra.mxu0 0.0
      %415 = vmatprep.subr.mxu0 0.0
      %416 = vmatpush1.msra.mxu0 0.0
      %417 = vmatprep.subr.mxu0 0.0
      %418 = vmatpush1.msra.mxu0 0.0
      %419 = vmatprep.mubr.f32.mxu0 0.0
      %420 = vmatmul.mubr.f32.gmra.mrb[0].mxu0 %v347
      %v421 = vpop.f32.mrb[0].mxu0
      %v422 = vadd.f32 %v272, %v421
      %v423 = vpop.f32.mrb[0].mxu0
      %v424 = vadd.f32 %v274, %v423
      %425 = vdwg.mxu0
      %426 = vmatprep.subr.mxu0 0.0
      %427 = vmatpush1.msra.mxu0 %v353
      %428 = vmatprep.subr.mxu0 0.0
      %429 = vmatpush1.msra.mxu0 0.0
      %430 = vmatprep.subr.mxu0 0.0
      %431 = vmatpush1.msra.mxu0 0.0
      %432 = vmatprep.subr.mxu0 0.0
      %433 = vmatpush1.msra.mxu0 0.0
      %434 = vmatprep.subr.mxu0 0.0
      %435 = vmatpush1.msra.mxu0 0.0
      %436 = vmatprep.subr.mxu0 0.0
      %437 = vmatpush1.msra.mxu0 0.0
      %438 = vmatprep.subr.mxu0 0.0
      %439 = vmatpush1.msra.mxu0 0.0
      %440 = vmatprep.subr.mxu0 0.0
      %441 = vmatpush1.msra.mxu0 0.0
      %442 = vmatprep.subr.mxu0 0.0
      %443 = vmatpush1.msra.mxu0 0.0
      %444 = vmatprep.subr.mxu0 0.0
      %445 = vmatpush1.msra.mxu0 0.0
      %446 = vmatprep.subr.mxu0 0.0
      %447 = vmatpush1.msra.mxu0 0.0
      %448 = vmatprep.subr.mxu0 0.0
      %449 = vmatpush1.msra.mxu0 0.0
      %450 = vmatprep.subr.mxu0 0.0
      %451 = vmatpush1.msra.mxu0 0.0
      %452 = vmatprep.subr.mxu0 0.0
      %453 = vmatpush1.msra.mxu0 0.0
      %454 = vmatprep.subr.mxu0 0.0
      %455 = vmatpush1.msra.mxu0 0.0
      %456 = vmatprep.subr.mxu0 0.0
      %457 = vmatpush1.msra.mxu0 0.0
      %458 = vmatprep.subr.mxu0 0.0
      %459 = vmatpush1.msra.mxu0 0.0
      %460 = vmatprep.subr.mxu0 0.0
      %461 = vmatpush1.msra.mxu0 0.0
      %462 = vmatprep.subr.mxu0 0.0
      %463 = vmatpush1.msra.mxu0 0.0
      %464 = vmatprep.subr.mxu0 0.0
      %465 = vmatpush1.msra.mxu0 0.0
      %466 = vmatprep.subr.mxu0 0.0
      %467 = vmatpush1.msra.mxu0 0.0
      %468 = vmatprep.subr.mxu0 0.0
      %469 = vmatpush1.msra.mxu0 0.0
      %470 = vmatprep.subr.mxu0 0.0
      %471 = vmatpush1.msra.mxu0 0.0
      %472 = vmatprep.subr.mxu0 0.0
      %473 = vmatpush1.msra.mxu0 0.0
      %474 = vmatprep.subr.mxu0 0.0
      %475 = vmatpush1.msra.mxu0 0.0
      %476 = vmatprep.subr.mxu0 0.0
      %477 = vmatpush1.msra.mxu0 0.0
      %478 = vmatprep.subr.mxu0 0.0
      %479 = vmatpush1.msra.mxu0 0.0
      %480 = vmatprep.subr.mxu0 0.0
      %481 = vmatpush1.msra.mxu0 0.0
      %482 = vmatprep.subr.mxu0 0.0
      %483 = vmatpush1.msra.mxu0 0.0
      %484 = vmatprep.subr.mxu0 0.0
      %485 = vmatpush1.msra.mxu0 0.0
      %486 = vmatprep.subr.mxu0 0.0
      %487 = vmatpush1.msra.mxu0 0.0
      %488 = vmatprep.subr.mxu0 0.0
      %489 = vmatpush1.msra.mxu0 0.0
      %490 = vmatprep.mubr.f32.mxu0 0.0
      %491 = vmatmul.mubr.f32.gmra.mrb[0].mxu0 %v347
      %v492 = vpop.f32.mrb[0].mxu0
      %v493 = vadd.f32 %v343, %v492
      %v494 = vpop.f32.mrb[0].mxu0
      %495 = vdwg.mxu0
      %496 = vrot.lane.b32.xlu0 %v171, 126
      %v497 = vpop.permute.xlu0 %496
      %498 = vrot.lane.b32.xlu0 %v184, 126
      %v499 = vpop.permute.xlu0 %498
      %500 = vrot.lane.b32.xlu0 %v172, 126
      %v501 = vpop.permute.xlu0 %500
      %vm502 = vcmask 1031168
      %v503 = vsel %vm502, %v497, %v499
      %v504 = vsel %vm502, %v499, %v501
      %v506 = vsel %vm194, %v175, 0
      %v508 = vsel %vm198, %v503, 0
      %v510 = vsel %vm198, %v504, 0
      %v512 = vsel %vm198, %v501, 0
      %514 = vmatprep.subr.mxu0 %v510
      %515 = vmatpush1.msra.mxu0 %v508
      %516 = vmatprep.subr.mxu0 0.0
      %517 = vmatpush1.msra.mxu0 0.0
      %518 = vmatprep.subr.mxu0 0.0
      %519 = vmatpush1.msra.mxu0 0.0
      %520 = vmatprep.subr.mxu0 0.0
      %521 = vmatpush1.msra.mxu0 0.0
      %522 = vmatprep.subr.mxu0 0.0
      %523 = vmatpush1.msra.mxu0 0.0
      %524 = vmatprep.subr.mxu0 0.0
      %525 = vmatpush1.msra.mxu0 0.0
      %526 = vmatprep.subr.mxu0 0.0
      %527 = vmatpush1.msra.mxu0 0.0
      %528 = vmatprep.subr.mxu0 0.0
      %529 = vmatpush1.msra.mxu0 0.0
      %530 = vmatprep.subr.mxu0 0.0
      %531 = vmatpush1.msra.mxu0 0.0
      %532 = vmatprep.subr.mxu0 0.0
      %533 = vmatpush1.msra.mxu0 0.0
      %534 = vmatprep.subr.mxu0 0.0
      %535 = vmatpush1.msra.mxu0 0.0
      %536 = vmatprep.subr.mxu0 0.0
      %537 = vmatpush1.msra.mxu0 0.0
      %538 = vmatprep.subr.mxu0 0.0
      %539 = vmatpush1.msra.mxu0 0.0
      %540 = vmatprep.subr.mxu0 0.0
      %541 = vmatpush1.msra.mxu0 0.0
      %542 = vmatprep.subr.mxu0 0.0
      %543 = vmatpush1.msra.mxu0 0.0
      %544 = vmatprep.subr.mxu0 0.0
      %545 = vmatpush1.msra.mxu0 0.0
      %546 = vmatprep.subr.mxu0 0.0
      %547 = vmatpush1.msra.mxu0 0.0
      %548 = vmatprep.subr.mxu0 0.0
      %549 = vmatpush1.msra.mxu0 0.0
      %550 = vmatprep.subr.mxu0 0.0
      %551 = vmatpush1.msra.mxu0 0.0
      %552 = vmatprep.subr.mxu0 0.0
      %553 = vmatpush1.msra.mxu0 0.0
      %554 = vmatprep.subr.mxu0 0.0
      %555 = vmatpush1.msra.mxu0 0.0
      %556 = vmatprep.subr.mxu0 0.0
      %557 = vmatpush1.msra.mxu0 0.0
      %558 = vmatprep.subr.mxu0 0.0
      %559 = vmatpush1.msra.mxu0 0.0
      %560 = vmatprep.subr.mxu0 0.0
      %561 = vmatpush1.msra.mxu0 0.0
      %562 = vmatprep.subr.mxu0 0.0
      %563 = vmatpush1.msra.mxu0 0.0
      %564 = vmatprep.subr.mxu0 0.0
      %565 = vmatpush1.msra.mxu0 0.0
      %566 = vmatprep.subr.mxu0 0.0
      %567 = vmatpush1.msra.mxu0 0.0
      %568 = vmatprep.subr.mxu0 0.0
      %569 = vmatpush1.msra.mxu0 0.0
      %570 = vmatprep.subr.mxu0 0.0
      %571 = vmatpush1.msra.mxu0 0.0
      %572 = vmatprep.subr.mxu0 0.0
      %573 = vmatpush1.msra.mxu0 0.0
      %574 = vmatprep.subr.mxu0 0.0
      %575 = vmatpush1.msra.mxu0 0.0
      %576 = vmatprep.subr.mxu0 0.0
      %577 = vmatpush1.msra.mxu0 0.0
      %578 = vmatprep.mubr.f32.mxu0 0.0
      %579 = vmatmul.mubr.f32.gmra.mrb[0].mxu0 %v506
      %v580 = vpop.f32.mrb[0].mxu0
      %v581 = vadd.f32 0.0, %v580
      %v582 = vpop.f32.mrb[0].mxu0
      %v583 = vadd.f32 0.0, %v582
      %584 = vdwg.mxu0
      %585 = vmatprep.subr.mxu0 0.0
      %586 = vmatpush1.msra.mxu0 %v512
      %587 = vmatprep.subr.mxu0 0.0
      %588 = vmatpush1.msra.mxu0 0.0
      %589 = vmatprep.subr.mxu0 0.0
      %590 = vmatpush1.msra.mxu0 0.0
      %591 = vmatprep.subr.mxu0 0.0
      %592 = vmatpush1.msra.mxu0 0.0
      %593 = vmatprep.subr.mxu0 0.0
      %594 = vmatpush1.msra.mxu0 0.0
      %595 = vmatprep.subr.mxu0 0.0
      %596 = vmatpush1.msra.mxu0 0.0
      %597 = vmatprep.subr.mxu0 0.0
      %598 = vmatpush1.msra.mxu0 0.0
      %599 = vmatprep.subr.mxu0 0.0
      %600 = vmatpush1.msra.mxu0 0.0
      %601 = vmatprep.subr.mxu0 0.0
      %602 = vmatpush1.msra.mxu0 0.0
      %603 = vmatprep.subr.mxu0 0.0
      %604 = vmatpush1.msra.mxu0 0.0
      %605 = vmatprep.subr.mxu0 0.0
      %606 = vmatpush1.msra.mxu0 0.0
      %607 = vmatprep.subr.mxu0 0.0
      %608 = vmatpush1.msra.mxu0 0.0
      %609 = vmatprep.subr.mxu0 0.0
      %610 = vmatpush1.msra.mxu0 0.0
      %611 = vmatprep.subr.mxu0 0.0
      %612 = vmatpush1.msra.mxu0 0.0
      %613 = vmatprep.subr.mxu0 0.0
      %614 = vmatpush1.msra.mxu0 0.0
      %615 = vmatprep.subr.mxu0 0.0
      %616 = vmatpush1.msra.mxu0 0.0
      %617 = vmatprep.subr.mxu0 0.0
      %618 = vmatpush1.msra.mxu0 0.0
      %619 = vmatprep.subr.mxu0 0.0
      %620 = vmatpush1.msra.mxu0 0.0
      %621 = vmatprep.subr.mxu0 0.0
      %622 = vmatpush1.msra.mxu0 0.0
      %623 = vmatprep.subr.mxu0 0.0
      %624 = vmatpush1.msra.mxu0 0.0
      %625 = vmatprep.subr.mxu0 0.0
      %626 = vmatpush1.msra.mxu0 0.0
      %627 = vmatprep.subr.mxu0 0.0
      %628 = vmatpush1.msra.mxu0 0.0
      %629 = vmatprep.subr.mxu0 0.0
      %630 = vmatpush1.msra.mxu0 0.0
      %631 = vmatprep.subr.mxu0 0.0
      %632 = vmatpush1.msra.mxu0 0.0
      %633 = vmatprep.subr.mxu0 0.0
      %634 = vmatpush1.msra.mxu0 0.0
      %635 = vmatprep.subr.mxu0 0.0
      %636 = vmatpush1.msra.mxu0 0.0
      %637 = vmatprep.subr.mxu0 0.0
      %638 = vmatpush1.msra.mxu0 0.0
      %639 = vmatprep.subr.mxu0 0.0
      %640 = vmatpush1.msra.mxu0 0.0
      %641 = vmatprep.subr.mxu0 0.0
      %642 = vmatpush1.msra.mxu0 0.0
      %643 = vmatprep.subr.mxu0 0.0
      %644 = vmatpush1.msra.mxu0 0.0
      %645 = vmatprep.subr.mxu0 0.0
      %646 = vmatpush1.msra.mxu0 0.0
      %647 = vmatprep.subr.mxu0 0.0
      %648 = vmatpush1.msra.mxu0 0.0
      %649 = vmatprep.mubr.f32.mxu0 0.0
      %650 = vmatmul.mubr.f32.gmra.mrb[0].mxu0 %v506
      %v651 = vpop.f32.mrb[0].mxu0
      %v652 = vadd.f32 0.0, %v651
      %v653 = vpop.f32.mrb[0].mxu0
      %654 = vdwg.mxu0
      %v655 = vadd.f32 %v422, %v581
      %v656 = vadd.f32 %v424, %v583
      %v657 = vadd.f32 %v493, %v652
      %658 = vrot.lane.b32.xlu0 %v171, 110
      %v659 = vpop.permute.xlu0 %658
      %660 = vrot.lane.b32.xlu0 %v184, 110
      %v661 = vpop.permute.xlu0 %660
      %662 = vrot.lane.b32.xlu0 %v172, 110
      %v663 = vpop.permute.xlu0 %662
      %vm664 = vcmask 900096
      %v665 = vsel %vm664, %v659, %v661
      %v666 = vsel %vm664, %v661, %v663
      %v668 = vsel %vm194, %v176, 0
      %v670 = vsel %vm198, %v665, 0
      %v672 = vsel %vm198, %v666, 0
      %v674 = vsel %vm198, %v663, 0
      %676 = vmatprep.subr.mxu0 %v672
      %677 = vmatpush1.msra.mxu0 %v670
      %678 = vmatprep.subr.mxu0 0.0
      %679 = vmatpush1.msra.mxu0 0.0
      %680 = vmatprep.subr.mxu0 0.0
      %681 = vmatpush1.msra.mxu0 0.0
      %682 = vmatprep.subr.mxu0 0.0
      %683 = vmatpush1.msra.mxu0 0.0
      %684 = vmatprep.subr.mxu0 0.0
      %685 = vmatpush1.msra.mxu0 0.0
      %686 = vmatprep.subr.mxu0 0.0
      %687 = vmatpush1.msra.mxu0 0.0
      %688 = vmatprep.subr.mxu0 0.0
      %689 = vmatpush1.msra.mxu0 0.0
      %690 = vmatprep.subr.mxu0 0.0
      %691 = vmatpush1.msra.mxu0 0.0
      %692 = vmatprep.subr.mxu0 0.0
      %693 = vmatpush1.msra.mxu0 0.0
      %694 = vmatprep.subr.mxu0 0.0
      %695 = vmatpush1.msra.mxu0 0.0
      %696 = vmatprep.subr.mxu0 0.0
      %697 = vmatpush1.msra.mxu0 0.0
      %698 = vmatprep.subr.mxu0 0.0
      %699 = vmatpush1.msra.mxu0 0.0
      %700 = vmatprep.subr.mxu0 0.0
      %701 = vmatpush1.msra.mxu0 0.0
      %702 = vmatprep.subr.mxu0 0.0
      %703 = vmatpush1.msra.mxu0 0.0
      %704 = vmatprep.subr.mxu0 0.0
      %705 = vmatpush1.msra.mxu0 0.0
      %706 = vmatprep.subr.mxu0 0.0
      %707 = vmatpush1.msra.mxu0 0.0
      %708 = vmatprep.subr.mxu0 0.0
      %709 = vmatpush1.msra.mxu0 0.0
      %710 = vmatprep.subr.mxu0 0.0
      %711 = vmatpush1.msra.mxu0 0.0
      %712 = vmatprep.subr.mxu0 0.0
      %713 = vmatpush1.msra.mxu0 0.0
      %714 = vmatprep.subr.mxu0 0.0
      %715 = vmatpush1.msra.mxu0 0.0
      %716 = vmatprep.subr.mxu0 0.0
      %717 = vmatpush1.msra.mxu0 0.0
      %718 = vmatprep.subr.mxu0 0.0
      %719 = vmatpush1.msra.mxu0 0.0
      %720 = vmatprep.subr.mxu0 0.0
      %721 = vmatpush1.msra.mxu0 0.0
      %722 = vmatprep.subr.mxu0 0.0
      %723 = vmatpush1.msra.mxu0 0.0
      %724 = vmatprep.subr.mxu0 0.0
      %725 = vmatpush1.msra.mxu0 0.0
      %726 = vmatprep.subr.mxu0 0.0
      %727 = vmatpush1.msra.mxu0 0.0
      %728 = vmatprep.subr.mxu0 0.0
      %729 = vmatpush1.msra.mxu0 0.0
      %730 = vmatprep.subr.mxu0 0.0
      %731 = vmatpush1.msra.mxu0 0.0
      %732 = vmatprep.subr.mxu0 0.0
      %733 = vmatpush1.msra.mxu0 0.0
      %734 = vmatprep.subr.mxu0 0.0
      %735 = vmatpush1.msra.mxu0 0.0
      %736 = vmatprep.subr.mxu0 0.0
      %737 = vmatpush1.msra.mxu0 0.0
      %738 = vmatprep.subr.mxu0 0.0
      %739 = vmatpush1.msra.mxu0 0.0
      %740 = vmatprep.mubr.f32.mxu0 0.0
      %741 = vmatmul.mubr.f32.gmra.mrb[0].mxu0 %v668
      %v742 = vpop.f32.mrb[0].mxu0
      %v743 = vadd.f32 0.0, %v742
      %v744 = vpop.f32.mrb[0].mxu0
      %v745 = vadd.f32 0.0, %v744
      %746 = vdwg.mxu0
      %747 = vmatprep.subr.mxu0 0.0
      %748 = vmatpush1.msra.mxu0 %v674
      %749 = vmatprep.subr.mxu0 0.0
      %750 = vmatpush1.msra.mxu0 0.0
      %751 = vmatprep.subr.mxu0 0.0
      %752 = vmatpush1.msra.mxu0 0.0
      %753 = vmatprep.subr.mxu0 0.0
      %754 = vmatpush1.msra.mxu0 0.0
      %755 = vmatprep.subr.mxu0 0.0
      %756 = vmatpush1.msra.mxu0 0.0
      %757 = vmatprep.subr.mxu0 0.0
      %758 = vmatpush1.msra.mxu0 0.0
      %759 = vmatprep.subr.mxu0 0.0
      %760 = vmatpush1.msra.mxu0 0.0
      %761 = vmatprep.subr.mxu0 0.0
      %762 = vmatpush1.msra.mxu0 0.0
      %763 = vmatprep.subr.mxu0 0.0
      %764 = vmatpush1.msra.mxu0 0.0
      %765 = vmatprep.subr.mxu0 0.0
      %766 = vmatpush1.msra.mxu0 0.0
      %767 = vmatprep.subr.mxu0 0.0
      %768 = vmatpush1.msra.mxu0 0.0
      %769 = vmatprep.subr.mxu0 0.0
      %770 = vmatpush1.msra.mxu0 0.0
      %771 = vmatprep.subr.mxu0 0.0
      %772 = vmatpush1.msra.mxu0 0.0
      %773 = vmatprep.subr.mxu0 0.0
      %774 = vmatpush1.msra.mxu0 0.0
      %775 = vmatprep.subr.mxu0 0.0
      %776 = vmatpush1.msra.mxu0 0.0
      %777 = vmatprep.subr.mxu0 0.0
      %778 = vmatpush1.msra.mxu0 0.0
      %779 = vmatprep.subr.mxu0 0.0
      %780 = vmatpush1.msra.mxu0 0.0
      %781 = vmatprep.subr.mxu0 0.0
      %782 = vmatpush1.msra.mxu0 0.0
      %783 = vmatprep.subr.mxu0 0.0
      %784 = vmatpush1.msra.mxu0 0.0
      %785 = vmatprep.subr.mxu0 0.0
      %786 = vmatpush1.msra.mxu0 0.0
      %787 = vmatprep.subr.mxu0 0.0
      %788 = vmatpush1.msra.mxu0 0.0
      %789 = vmatprep.subr.mxu0 0.0
      %790 = vmatpush1.msra.mxu0 0.0
      %791 = vmatprep.subr.mxu0 0.0
      %792 = vmatpush1.msra.mxu0 0.0
      %793 = vmatprep.subr.mxu0 0.0
      %794 = vmatpush1.msra.mxu0 0.0
      %795 = vmatprep.subr.mxu0 0.0
      %796 = vmatpush1.msra.mxu0 0.0
      %797 = vmatprep.subr.mxu0 0.0
      %798 = vmatpush1.msra.mxu0 0.0
      %799 = vmatprep.subr.mxu0 0.0
      %800 = vmatpush1.msra.mxu0 0.0
      %801 = vmatprep.subr.mxu0 0.0
      %802 = vmatpush1.msra.mxu0 0.0
      %803 = vmatprep.subr.mxu0 0.0
      %804 = vmatpush1.msra.mxu0 0.0
      %805 = vmatprep.subr.mxu0 0.0
      %806 = vmatpush1.msra.mxu0 0.0
      %807 = vmatprep.subr.mxu0 0.0
      %808 = vmatpush1.msra.mxu0 0.0
      %809 = vmatprep.subr.mxu0 0.0
      %810 = vmatpush1.msra.mxu0 0.0
      %811 = vmatprep.mubr.f32.mxu0 0.0
      %812 = vmatmul.mubr.f32.gmra.mrb[0].mxu0 %v668
      %v813 = vpop.f32.mrb[0].mxu0
      %v814 = vadd.f32 0.0, %v813
      %v815 = vpop.f32.mrb[0].mxu0
      %816 = vdwg.mxu0
      %v817 = vadd.f32 %v655, %v743
      %v818 = vadd.f32 %v656, %v745
      %v819 = vadd.f32 %v657, %v814
      %820 = vrot.lane.b32.xlu0 %v171, 109
      %v821 = vpop.permute.xlu0 %820
      %822 = vrot.lane.b32.xlu0 %v184, 109
      %v823 = vpop.permute.xlu0 %822
      %824 = vrot.lane.b32.xlu0 %v172, 109
      %v825 = vpop.permute.xlu0 %824
      %vm826 = vcmask 891904
      %v827 = vsel %vm826, %v821, %v823
      %v828 = vsel %vm826, %v823, %v825
      %v830 = vsel %vm194, %v177, 0
      %v832 = vsel %vm198, %v827, 0
      %v834 = vsel %vm198, %v828, 0
      %v836 = vsel %vm198, %v825, 0
      %838 = vmatprep.subr.mxu0 %v834
      %839 = vmatpush1.msra.mxu0 %v832
      %840 = vmatprep.subr.mxu0 0.0
      %841 = vmatpush1.msra.mxu0 0.0
      %842 = vmatprep.subr.mxu0 0.0
      %843 = vmatpush1.msra.mxu0 0.0
      %844 = vmatprep.subr.mxu0 0.0
      %845 = vmatpush1.msra.mxu0 0.0
      %846 = vmatprep.subr.mxu0 0.0
      %847 = vmatpush1.msra.mxu0 0.0
      %848 = vmatprep.subr.mxu0 0.0
      %849 = vmatpush1.msra.mxu0 0.0
      %850 = vmatprep.subr.mxu0 0.0
      %851 = vmatpush1.msra.mxu0 0.0
      %852 = vmatprep.subr.mxu0 0.0
      %853 = vmatpush1.msra.mxu0 0.0
      %854 = vmatprep.subr.mxu0 0.0
      %855 = vmatpush1.msra.mxu0 0.0
      %856 = vmatprep.subr.mxu0 0.0
      %857 = vmatpush1.msra.mxu0 0.0
      %858 = vmatprep.subr.mxu0 0.0
      %859 = vmatpush1.msra.mxu0 0.0
      %860 = vmatprep.subr.mxu0 0.0
      %861 = vmatpush1.msra.mxu0 0.0
      %862 = vmatprep.subr.mxu0 0.0
      %863 = vmatpush1.msra.mxu0 0.0
      %864 = vmatprep.subr.mxu0 0.0
      %865 = vmatpush1.msra.mxu0 0.0
      %866 = vmatprep.subr.mxu0 0.0
      %867 = vmatpush1.msra.mxu0 0.0
      %868 = vmatprep.subr.mxu0 0.0
      %869 = vmatpush1.msra.mxu0 0.0
      %870 = vmatprep.subr.mxu0 0.0
      %871 = vmatpush1.msra.mxu0 0.0
      %872 = vmatprep.subr.mxu0 0.0
      %873 = vmatpush1.msra.mxu0 0.0
      %874 = vmatprep.subr.mxu0 0.0
      %875 = vmatpush1.msra.mxu0 0.0
      %876 = vmatprep.subr.mxu0 0.0
      %877 = vmatpush1.msra.mxu0 0.0
      %878 = vmatprep.subr.mxu0 0.0
      %879 = vmatpush1.msra.mxu0 0.0
      %880 = vmatprep.subr.mxu0 0.0
      %881 = vmatpush1.msra.mxu0 0.0
      %882 = vmatprep.subr.mxu0 0.0
      %883 = vmatpush1.msra.mxu0 0.0
      %884 = vmatprep.subr.mxu0 0.0
      %885 = vmatpush1.msra.mxu0 0.0
      %886 = vmatprep.subr.mxu0 0.0
      %887 = vmatpush1.msra.mxu0 0.0
      %888 = vmatprep.subr.mxu0 0.0
      %889 = vmatpush1.msra.mxu0 0.0
      %890 = vmatprep.subr.mxu0 0.0
      %891 = vmatpush1.msra.mxu0 0.0
      %892 = vmatprep.subr.mxu0 0.0
      %893 = vmatpush1.msra.mxu0 0.0
      %894 = vmatprep.subr.mxu0 0.0
      %895 = vmatpush1.msra.mxu0 0.0
      %896 = vmatprep.subr.mxu0 0.0
      %897 = vmatpush1.msra.mxu0 0.0
      %898 = vmatprep.subr.mxu0 0.0
      %899 = vmatpush1.msra.mxu0 0.0
      %900 = vmatprep.subr.mxu0 0.0
      %901 = vmatpush1.msra.mxu0 0.0
      %902 = vmatprep.mubr.f32.mxu0 0.0
      %903 = vmatmul.mubr.f32.gmra.mrb[0].mxu0 %v830
      %v904 = vpop.f32.mrb[0].mxu0
      %v905 = vadd.f32 0.0, %v904
      %v906 = vpop.f32.mrb[0].mxu0
      %v907 = vadd.f32 0.0, %v906
      %908 = vdwg.mxu0
      %909 = vmatprep.subr.mxu0 0.0
      %910 = vmatpush1.msra.mxu0 %v836
      %911 = vmatprep.subr.mxu0 0.0
      %912 = vmatpush1.msra.mxu0 0.0
      %913 = vmatprep.subr.mxu0 0.0
      %914 = vmatpush1.msra.mxu0 0.0
      %915 = vmatprep.subr.mxu0 0.0
      %916 = vmatpush1.msra.mxu0 0.0
      %917 = vmatprep.subr.mxu0 0.0
      %918 = vmatpush1.msra.mxu0 0.0
      %919 = vmatprep.subr.mxu0 0.0
      %920 = vmatpush1.msra.mxu0 0.0
      %921 = vmatprep.subr.mxu0 0.0
      %922 = vmatpush1.msra.mxu0 0.0
      %923 = vmatprep.subr.mxu0 0.0
      %924 = vmatpush1.msra.mxu0 0.0
      %925 = vmatprep.subr.mxu0 0.0
      %926 = vmatpush1.msra.mxu0 0.0
      %927 = vmatprep.subr.mxu0 0.0
      %928 = vmatpush1.msra.mxu0 0.0
      %929 = vmatprep.subr.mxu0 0.0
      %930 = vmatpush1.msra.mxu0 0.0
      %931 = vmatprep.subr.mxu0 0.0
      %932 = vmatpush1.msra.mxu0 0.0
      %933 = vmatprep.subr.mxu0 0.0
      %934 = vmatpush1.msra.mxu0 0.0
      %935 = vmatprep.subr.mxu0 0.0
      %936 = vmatpush1.msra.mxu0 0.0
      %937 = vmatprep.subr.mxu0 0.0
      %938 = vmatpush1.msra.mxu0 0.0
      %939 = vmatprep.subr.mxu0 0.0
      %940 = vmatpush1.msra.mxu0 0.0
      %941 = vmatprep.subr.mxu0 0.0
      %942 = vmatpush1.msra.mxu0 0.0
      %943 = vmatprep.subr.mxu0 0.0
      %944 = vmatpush1.msra.mxu0 0.0
      %945 = vmatprep.subr.mxu0 0.0
      %946 = vmatpush1.msra.mxu0 0.0
      %947 = vmatprep.subr.mxu0 0.0
      %948 = vmatpush1.msra.mxu0 0.0
      %949 = vmatprep.subr.mxu0 0.0
      %950 = vmatpush1.msra.mxu0 0.0
      %951 = vmatprep.subr.mxu0 0.0
      %952 = vmatpush1.msra.mxu0 0.0
      %953 = vmatprep.subr.mxu0 0.0
      %954 = vmatpush1.msra.mxu0 0.0
      %955 = vmatprep.subr.mxu0 0.0
      %956 = vmatpush1.msra.mxu0 0.0
      %957 = vmatprep.subr.mxu0 0.0
      %958 = vmatpush1.msra.mxu0 0.0
      %959 = vmatprep.subr.mxu0 0.0
      %960 = vmatpush1.msra.mxu0 0.0
      %961 = vmatprep.subr.mxu0 0.0
      %962 = vmatpush1.msra.mxu0 0.0
      %963 = vmatprep.subr.mxu0 0.0
      %964 = vmatpush1.msra.mxu0 0.0
      %965 = vmatprep.subr.mxu0 0.0
      %966 = vmatpush1.msra.mxu0 0.0
      %967 = vmatprep.subr.mxu0 0.0
      %968 = vmatpush1.msra.mxu0 0.0
      %969 = vmatprep.subr.mxu0 0.0
      %970 = vmatpush1.msra.mxu0 0.0
      %971 = vmatprep.subr.mxu0 0.0
      %972 = vmatpush1.msra.mxu0 0.0
      %973 = vmatprep.mubr.f32.mxu0 0.0
      %974 = vmatmul.mubr.f32.gmra.mrb[0].mxu0 %v830
      %v975 = vpop.f32.mrb[0].mxu0
      %v976 = vadd.f32 0.0, %v975
      %v977 = vpop.f32.mrb[0].mxu0
      %978 = vdwg.mxu0
      %v979 = vadd.f32 %v817, %v905
      %v980 = vadd.f32 %v818, %v907
      %v981 = vadd.f32 %v819, %v976
      %982 = vrot.lane.b32.xlu0 %v171, 108
      %v983 = vpop.permute.xlu0 %982
      %984 = vrot.lane.b32.xlu0 %v184, 108
      %v985 = vpop.permute.xlu0 %984
      %986 = vrot.lane.b32.xlu0 %v172, 108
      %v987 = vpop.permute.xlu0 %986
      %vm988 = vcmask 883712
      %v989 = vsel %vm988, %v983, %v985
      %v990 = vsel %vm988, %v985, %v987
      %v992 = vsel %vm194, %v178, 0
      %v994 = vsel %vm198, %v989, 0
      %v996 = vsel %vm198, %v990, 0
      %v998 = vsel %vm198, %v987, 0
      %1000 = vmatprep.subr.mxu0 %v996
      %1001 = vmatpush1.msra.mxu0 %v994
      %1002 = vmatprep.subr.mxu0 0.0
      %1003 = vmatpush1.msra.mxu0 0.0
      %1004 = vmatprep.subr.mxu0 0.0
      %1005 = vmatpush1.msra.mxu0 0.0
      %1006 = vmatprep.subr.mxu0 0.0
      %1007 = vmatpush1.msra.mxu0 0.0
      %1008 = vmatprep.subr.mxu0 0.0
      %1009 = vmatpush1.msra.mxu0 0.0
      %1010 = vmatprep.subr.mxu0 0.0
      %1011 = vmatpush1.msra.mxu0 0.0
      %1012 = vmatprep.subr.mxu0 0.0
      %1013 = vmatpush1.msra.mxu0 0.0
      %1014 = vmatprep.subr.mxu0 0.0
      %1015 = vmatpush1.msra.mxu0 0.0
      %1016 = vmatprep.subr.mxu0 0.0
      %1017 = vmatpush1.msra.mxu0 0.0
      %1018 = vmatprep.subr.mxu0 0.0
      %1019 = vmatpush1.msra.mxu0 0.0
      %1020 = vmatprep.subr.mxu0 0.0
      %1021 = vmatpush1.msra.mxu0 0.0
      %1022 = vmatprep.subr.mxu0 0.0
      %1023 = vmatpush1.msra.mxu0 0.0
      %1024 = vmatprep.subr.mxu0 0.0
      %1025 = vmatpush1.msra.mxu0 0.0
      %1026 = vmatprep.subr.mxu0 0.0
      %1027 = vmatpush1.msra.mxu0 0.0
      %1028 = vmatprep.subr.mxu0 0.0
      %1029 = vmatpush1.msra.mxu0 0.0
      %1030 = vmatprep.subr.mxu0 0.0
      %1031 = vmatpush1.msra.mxu0 0.0
      %1032 = vmatprep.subr.mxu0 0.0
      %1033 = vmatpush1.msra.mxu0 0.0
      %1034 = vmatprep.subr.mxu0 0.0
      %1035 = vmatpush1.msra.mxu0 0.0
      %1036 = vmatprep.subr.mxu0 0.0
      %1037 = vmatpush1.msra.mxu0 0.0
      %1038 = vmatprep.subr.mxu0 0.0
      %1039 = vmatpush1.msra.mxu0 0.0
      %1040 = vmatprep.subr.mxu0 0.0
      %1041 = vmatpush1.msra.mxu0 0.0
      %1042 = vmatprep.subr.mxu0 0.0
      %1043 = vmatpush1.msra.mxu0 0.0
      %1044 = vmatprep.subr.mxu0 0.0
      %1045 = vmatpush1.msra.mxu0 0.0
      %1046 = vmatprep.subr.mxu0 0.0
      %1047 = vmatpush1.msra.mxu0 0.0
      %1048 = vmatprep.subr.mxu0 0.0
      %1049 = vmatpush1.msra.mxu0 0.0
      %1050 = vmatprep.subr.mxu0 0.0
      %1051 = vmatpush1.msra.mxu0 0.0
      %1052 = vmatprep.subr.mxu0 0.0
      %1053 = vmatpush1.msra.mxu0 0.0
      %1054 = vmatprep.subr.mxu0 0.0
      %1055 = vmatpush1.msra.mxu0 0.0
      %1056 = vmatprep.subr.mxu0 0.0
      %1057 = vmatpush1.msra.mxu0 0.0
      %1058 = vmatprep.subr.mxu0 0.0
      %1059 = vmatpush1.msra.mxu0 0.0
      %1060 = vmatprep.subr.mxu0 0.0
      %1061 = vmatpush1.msra.mxu0 0.0
      %1062 = vmatprep.subr.mxu0 0.0
      %1063 = vmatpush1.msra.mxu0 0.0
      %1064 = vmatprep.mubr.f32.mxu0 0.0
      %1065 = vmatmul.mubr.f32.gmra.mrb[0].mxu0 %v992
      %v1066 = vpop.f32.mrb[0].mxu0
      %v1067 = vadd.f32 0.0, %v1066
      %v1068 = vpop.f32.mrb[0].mxu0
      %v1069 = vadd.f32 0.0, %v1068
      %1070 = vdwg.mxu0
      %1071 = vmatprep.subr.mxu0 0.0
      %1072 = vmatpush1.msra.mxu0 %v998
      %1073 = vmatprep.subr.mxu0 0.0
      %1074 = vmatpush1.msra.mxu0 0.0
      %1075 = vmatprep.subr.mxu0 0.0
      %1076 = vmatpush1.msra.mxu0 0.0
      %1077 = vmatprep.subr.mxu0 0.0
      %1078 = vmatpush1.msra.mxu0 0.0
      %1079 = vmatprep.subr.mxu0 0.0
      %1080 = vmatpush1.msra.mxu0 0.0
      %1081 = vmatprep.subr.mxu0 0.0
      %1082 = vmatpush1.msra.mxu0 0.0
      %1083 = vmatprep.subr.mxu0 0.0
      %1084 = vmatpush1.msra.mxu0 0.0
      %1085 = vmatprep.subr.mxu0 0.0
      %1086 = vmatpush1.msra.mxu0 0.0
      %1087 = vmatprep.subr.mxu0 0.0
      %1088 = vmatpush1.msra.mxu0 0.0
      %1089 = vmatprep.subr.mxu0 0.0
      %1090 = vmatpush1.msra.mxu0 0.0
      %1091 = vmatprep.subr.mxu0 0.0
      %1092 = vmatpush1.msra.mxu0 0.0
      %1093 = vmatprep.subr.mxu0 0.0
      %1094 = vmatpush1.msra.mxu0 0.0
      %1095 = vmatprep.subr.mxu0 0.0
      %1096 = vmatpush1.msra.mxu0 0.0
      %1097 = vmatprep.subr.mxu0 0.0
      %1098 = vmatpush1.msra.mxu0 0.0
      %1099 = vmatprep.subr.mxu0 0.0
      %1100 = vmatpush1.msra.mxu0 0.0
      %1101 = vmatprep.subr.mxu0 0.0
      %1102 = vmatpush1.msra.mxu0 0.0
      %1103 = vmatprep.subr.mxu0 0.0
      %1104 = vmatpush1.msra.mxu0 0.0
      %1105 = vmatprep.subr.mxu0 0.0
      %1106 = vmatpush1.msra.mxu0 0.0
      %1107 = vmatprep.subr.mxu0 0.0
      %1108 = vmatpush1.msra.mxu0 0.0
      %1109 = vmatprep.subr.mxu0 0.0
      %1110 = vmatpush1.msra.mxu0 0.0
      %1111 = vmatprep.subr.mxu0 0.0
      %1112 = vmatpush1.msra.mxu0 0.0
      %1113 = vmatprep.subr.mxu0 0.0
      %1114 = vmatpush1.msra.mxu0 0.0
      %1115 = vmatprep.subr.mxu0 0.0
      %1116 = vmatpush1.msra.mxu0 0.0
      %1117 = vmatprep.subr.mxu0 0.0
      %1118 = vmatpush1.msra.mxu0 0.0
      %1119 = vmatprep.subr.mxu0 0.0
      %1120 = vmatpush1.msra.mxu0 0.0
      %1121 = vmatprep.subr.mxu0 0.0
      %1122 = vmatpush1.msra.mxu0 0.0
      %1123 = vmatprep.subr.mxu0 0.0
      %1124 = vmatpush1.msra.mxu0 0.0
      %1125 = vmatprep.subr.mxu0 0.0
      %1126 = vmatpush1.msra.mxu0 0.0
      %1127 = vmatprep.subr.mxu0 0.0
      %1128 = vmatpush1.msra.mxu0 0.0
      %1129 = vmatprep.subr.mxu0 0.0
      %1130 = vmatpush1.msra.mxu0 0.0
      %1131 = vmatprep.subr.mxu0 0.0
      %1132 = vmatpush1.msra.mxu0 0.0
      %1133 = vmatprep.subr.mxu0 0.0
      %1134 = vmatpush1.msra.mxu0 0.0
      %1135 = vmatprep.mubr.f32.mxu0 0.0
      %1136 = vmatmul.mubr.f32.gmra.mrb[0].mxu0 %v992
      %v1137 = vpop.f32.mrb[0].mxu0
      %v1138 = vadd.f32 0.0, %v1137
      %v1139 = vpop.f32.mrb[0].mxu0
      %1140 = vdwg.mxu0
      %v1141 = vadd.f32 %v979, %v1067
      %v1142 = vadd.f32 %v980, %v1069
      %v1143 = vadd.f32 %v981, %v1138
      %1144 = vrot.lane.b32.xlu0 %v171, 92
      %v1145 = vpop.permute.xlu0 %1144
      %1146 = vrot.lane.b32.xlu0 %v184, 92
      %v1147 = vpop.permute.xlu0 %1146
      %1148 = vrot.lane.b32.xlu0 %v172, 92
      %v1149 = vpop.permute.xlu0 %1148
      %vm1150 = vcmask 752640
      %v1151 = vsel %vm1150, %v1145, %v1147
      %v1152 = vsel %vm1150, %v1147, %v1149
      %v1154 = vsel %vm194, %v179, 0
      %v1156 = vsel %vm198, %v1151, 0
      %v1158 = vsel %vm198, %v1152, 0
      %v1160 = vsel %vm198, %v1149, 0
      %1162 = vmatprep.subr.mxu0 %v1158
      %1163 = vmatpush1.msra.mxu0 %v1156
      %1164 = vmatprep.subr.mxu0 0.0
      %1165 = vmatpush1.msra.mxu0 0.0
      %1166 = vmatprep.subr.mxu0 0.0
      %1167 = vmatpush1.msra.mxu0 0.0
      %1168 = vmatprep.subr.mxu0 0.0
      %1169 = vmatpush1.msra.mxu0 0.0
      %1170 = vmatprep.subr.mxu0 0.0
      %1171 = vmatpush1.msra.mxu0 0.0
      %1172 = vmatprep.subr.mxu0 0.0
      %1173 = vmatpush1.msra.mxu0 0.0
      %1174 = vmatprep.subr.mxu0 0.0
      %1175 = vmatpush1.msra.mxu0 0.0
      %1176 = vmatprep.subr.mxu0 0.0
      %1177 = vmatpush1.msra.mxu0 0.0
      %1178 = vmatprep.subr.mxu0 0.0
      %1179 = vmatpush1.msra.mxu0 0.0
      %1180 = vmatprep.subr.mxu0 0.0
      %1181 = vmatpush1.msra.mxu0 0.0
      %1182 = vmatprep.subr.mxu0 0.0
      %1183 = vmatpush1.msra.mxu0 0.0
      %1184 = vmatprep.subr.mxu0 0.0
      %1185 = vmatpush1.msra.mxu0 0.0
      %1186 = vmatprep.subr.mxu0 0.0
      %1187 = vmatpush1.msra.mxu0 0.0
      %1188 = vmatprep.subr.mxu0 0.0
      %1189 = vmatpush1.msra.mxu0 0.0
      %1190 = vmatprep.subr.mxu0 0.0
      %1191 = vmatpush1.msra.mxu0 0.0
      %1192 = vmatprep.subr.mxu0 0.0
      %1193 = vmatpush1.msra.mxu0 0.0
      %1194 = vmatprep.subr.mxu0 0.0
      %1195 = vmatpush1.msra.mxu0 0.0
      %1196 = vmatprep.subr.mxu0 0.0
      %1197 = vmatpush1.msra.mxu0 0.0
      %1198 = vmatprep.subr.mxu0 0.0
      %1199 = vmatpush1.msra.mxu0 0.0
      %1200 = vmatprep.subr.mxu0 0.0
      %1201 = vmatpush1.msra.mxu0 0.0
      %1202 = vmatprep.subr.mxu0 0.0
      %1203 = vmatpush1.msra.mxu0 0.0
      %1204 = vmatprep.subr.mxu0 0.0
      %1205 = vmatpush1.msra.mxu0 0.0
      %1206 = vmatprep.subr.mxu0 0.0
      %1207 = vmatpush1.msra.mxu0 0.0
      %1208 = vmatprep.subr.mxu0 0.0
      %1209 = vmatpush1.msra.mxu0 0.0
      %1210 = vmatprep.subr.mxu0 0.0
      %1211 = vmatpush1.msra.mxu0 0.0
      %1212 = vmatprep.subr.mxu0 0.0
      %1213 = vmatpush1.msra.mxu0 0.0
      %1214 = vmatprep.subr.mxu0 0.0
      %1215 = vmatpush1.msra.mxu0 0.0
      %1216 = vmatprep.subr.mxu0 0.0
      %1217 = vmatpush1.msra.mxu0 0.0
      %1218 = vmatprep.subr.mxu0 0.0
      %1219 = vmatpush1.msra.mxu0 0.0
      %1220 = vmatprep.subr.mxu0 0.0
      %1221 = vmatpush1.msra.mxu0 0.0
      %1222 = vmatprep.subr.mxu0 0.0
      %1223 = vmatpush1.msra.mxu0 0.0
      %1224 = vmatprep.subr.mxu0 0.0
      %1225 = vmatpush1.msra.mxu0 0.0
      %1226 = vmatprep.mubr.f32.mxu0 0.0
      %1227 = vmatmul.mubr.f32.gmra.mrb[0].mxu0 %v1154
      %v1228 = vpop.f32.mrb[0].mxu0
      %v1229 = vadd.f32 0.0, %v1228
      %v1230 = vpop.f32.mrb[0].mxu0
      %v1231 = vadd.f32 0.0, %v1230
      %1232 = vdwg.mxu0
      %1233 = vmatprep.subr.mxu0 0.0
      %1234 = vmatpush1.msra.mxu0 %v1160
      %1235 = vmatprep.subr.mxu0 0.0
      %1236 = vmatpush1.msra.mxu0 0.0
      %1237 = vmatprep.subr.mxu0 0.0
      %1238 = vmatpush1.msra.mxu0 0.0
      %1239 = vmatprep.subr.mxu0 0.0
      %1240 = vmatpush1.msra.mxu0 0.0
      %1241 = vmatprep.subr.mxu0 0.0
      %1242 = vmatpush1.msra.mxu0 0.0
      %1243 = vmatprep.subr.mxu0 0.0
      %1244 = vmatpush1.msra.mxu0 0.0
      %1245 = vmatprep.subr.mxu0 0.0
      %1246 = vmatpush1.msra.mxu0 0.0
      %1247 = vmatprep.subr.mxu0 0.0
      %1248 = vmatpush1.msra.mxu0 0.0
      %1249 = vmatprep.subr.mxu0 0.0
      %1250 = vmatpush1.msra.mxu0 0.0
      %1251 = vmatprep.subr.mxu0 0.0
      %1252 = vmatpush1.msra.mxu0 0.0
      %1253 = vmatprep.subr.mxu0 0.0
      %1254 = vmatpush1.msra.mxu0 0.0
      %1255 = vmatprep.subr.mxu0 0.0
      %1256 = vmatpush1.msra.mxu0 0.0
      %1257 = vmatprep.subr.mxu0 0.0
      %1258 = vmatpush1.msra.mxu0 0.0
      %1259 = vmatprep.subr.mxu0 0.0
      %1260 = vmatpush1.msra.mxu0 0.0
      %1261 = vmatprep.subr.mxu0 0.0
      %1262 = vmatpush1.msra.mxu0 0.0
      %1263 = vmatprep.subr.mxu0 0.0
      %1264 = vmatpush1.msra.mxu0 0.0
      %1265 = vmatprep.subr.mxu0 0.0
      %1266 = vmatpush1.msra.mxu0 0.0
      %1267 = vmatprep.subr.mxu0 0.0
      %1268 = vmatpush1.msra.mxu0 0.0
      %1269 = vmatprep.subr.mxu0 0.0
      %1270 = vmatpush1.msra.mxu0 0.0
      %1271 = vmatprep.subr.mxu0 0.0
      %1272 = vmatpush1.msra.mxu0 0.0
      %1273 = vmatprep.subr.mxu0 0.0
      %1274 = vmatpush1.msra.mxu0 0.0
      %1275 = vmatprep.subr.mxu0 0.0
      %1276 = vmatpush1.msra.mxu0 0.0
      %1277 = vmatprep.subr.mxu0 0.0
      %1278 = vmatpush1.msra.mxu0 0.0
      %1279 = vmatprep.subr.mxu0 0.0
      %1280 = vmatpush1.msra.mxu0 0.0
      %1281 = vmatprep.subr.mxu0 0.0
      %1282 = vmatpush1.msra.mxu0 0.0
      %1283 = vmatprep.subr.mxu0 0.0
      %1284 = vmatpush1.msra.mxu0 0.0
      %1285 = vmatprep.subr.mxu0 0.0
      %1286 = vmatpush1.msra.mxu0 0.0
      %1287 = vmatprep.subr.mxu0 0.0
      %1288 = vmatpush1.msra.mxu0 0.0
      %1289 = vmatprep.subr.mxu0 0.0
      %1290 = vmatpush1.msra.mxu0 0.0
      %1291 = vmatprep.subr.mxu0 0.0
      %1292 = vmatpush1.msra.mxu0 0.0
      %1293 = vmatprep.subr.mxu0 0.0
      %1294 = vmatpush1.msra.mxu0 0.0
      %1295 = vmatprep.subr.mxu0 0.0
      %1296 = vmatpush1.msra.mxu0 0.0
      %1297 = vmatprep.mubr.f32.mxu0 0.0
      %1298 = vmatmul.mubr.f32.gmra.mrb[0].mxu0 %v1154
      %v1299 = vpop.f32.mrb[0].mxu0
      %v1300 = vadd.f32 0.0, %v1299
      %v1301 = vpop.f32.mrb[0].mxu0
      %1302 = vdwg.mxu0
      %v1303 = vadd.f32 %v1141, %v1229
      %v1304 = vadd.f32 %v1142, %v1231
      %v1305 = vadd.f32 %v1143, %v1300
      %1306 = vrot.lane.b32.xlu0 %v171, 91
      %v1307 = vpop.permute.xlu0 %1306
      %1308 = vrot.lane.b32.xlu0 %v184, 91
      %v1309 = vpop.permute.xlu0 %1308
      %1310 = vrot.lane.b32.xlu0 %v172, 91
      %v1311 = vpop.permute.xlu0 %1310
      %vm1312 = vcmask 744448
      %v1313 = vsel %vm1312, %v1307, %v1309
      %v1314 = vsel %vm1312, %v1309, %v1311
      %v1316 = vsel %vm194, %v180, 0
      %v1318 = vsel %vm198, %v1313, 0
      %v1320 = vsel %vm198, %v1314, 0
      %v1322 = vsel %vm198, %v1311, 0
      %1324 = vmatprep.subr.mxu0 %v1320
      %1325 = vmatpush1.msra.mxu0 %v1318
      %1326 = vmatprep.subr.mxu0 0.0
      %1327 = vmatpush1.msra.mxu0 0.0
      %1328 = vmatprep.subr.mxu0 0.0
      %1329 = vmatpush1.msra.mxu0 0.0
      %1330 = vmatprep.subr.mxu0 0.0
      %1331 = vmatpush1.msra.mxu0 0.0
      %1332 = vmatprep.subr.mxu0 0.0
      %1333 = vmatpush1.msra.mxu0 0.0
      %1334 = vmatprep.subr.mxu0 0.0
      %1335 = vmatpush1.msra.mxu0 0.0
      %1336 = vmatprep.subr.mxu0 0.0
      %1337 = vmatpush1.msra.mxu0 0.0
      %1338 = vmatprep.subr.mxu0 0.0
      %1339 = vmatpush1.msra.mxu0 0.0
      %1340 = vmatprep.subr.mxu0 0.0
      %1341 = vmatpush1.msra.mxu0 0.0
      %1342 = vmatprep.subr.mxu0 0.0
      %1343 = vmatpush1.msra.mxu0 0.0
      %1344 = vmatprep.subr.mxu0 0.0
      %1345 = vmatpush1.msra.mxu0 0.0
      %1346 = vmatprep.subr.mxu0 0.0
      %1347 = vmatpush1.msra.mxu0 0.0
      %1348 = vmatprep.subr.mxu0 0.0
      %1349 = vmatpush1.msra.mxu0 0.0
      %1350 = vmatprep.subr.mxu0 0.0
      %1351 = vmatpush1.msra.mxu0 0.0
      %1352 = vmatprep.subr.mxu0 0.0
      %1353 = vmatpush1.msra.mxu0 0.0
      %1354 = vmatprep.subr.mxu0 0.0
      %1355 = vmatpush1.msra.mxu0 0.0
      %1356 = vmatprep.subr.mxu0 0.0
      %1357 = vmatpush1.msra.mxu0 0.0
      %1358 = vmatprep.subr.mxu0 0.0
      %1359 = vmatpush1.msra.mxu0 0.0
      %1360 = vmatprep.subr.mxu0 0.0
      %1361 = vmatpush1.msra.mxu0 0.0
      %1362 = vmatprep.subr.mxu0 0.0
      %1363 = vmatpush1.msra.mxu0 0.0
      %1364 = vmatprep.subr.mxu0 0.0
      %1365 = vmatpush1.msra.mxu0 0.0
      %1366 = vmatprep.subr.mxu0 0.0
      %1367 = vmatpush1.msra.mxu0 0.0
      %1368 = vmatprep.subr.mxu0 0.0
      %1369 = vmatpush1.msra.mxu0 0.0
      %1370 = vmatprep.subr.mxu0 0.0
      %1371 = vmatpush1.msra.mxu0 0.0
      %1372 = vmatprep.subr.mxu0 0.0
      %1373 = vmatpush1.msra.mxu0 0.0
      %1374 = vmatprep.subr.mxu0 0.0
      %1375 = vmatpush1.msra.mxu0 0.0
      %1376 = vmatprep.subr.mxu0 0.0
      %1377 = vmatpush1.msra.mxu0 0.0
      %1378 = vmatprep.subr.mxu0 0.0
      %1379 = vmatpush1.msra.mxu0 0.0
      %1380 = vmatprep.subr.mxu0 0.0
      %1381 = vmatpush1.msra.mxu0 0.0
      %1382 = vmatprep.subr.mxu0 0.0
      %1383 = vmatpush1.msra.mxu0 0.0
      %1384 = vmatprep.subr.mxu0 0.0
      %1385 = vmatpush1.msra.mxu0 0.0
      %1386 = vmatprep.subr.mxu0 0.0
      %1387 = vmatpush1.msra.mxu0 0.0
      %1388 = vmatprep.mubr.f32.mxu0 0.0
      %1389 = vmatmul.mubr.f32.gmra.mrb[0].mxu0 %v1316
      %v1390 = vpop.f32.mrb[0].mxu0
      %v1391 = vadd.f32 0.0, %v1390
      %v1392 = vpop.f32.mrb[0].mxu0
      %v1393 = vadd.f32 0.0, %v1392
      %1394 = vdwg.mxu0
      %1395 = vmatprep.subr.mxu0 0.0
      %1396 = vmatpush1.msra.mxu0 %v1322
      %1397 = vmatprep.subr.mxu0 0.0
      %1398 = vmatpush1.msra.mxu0 0.0
      %1399 = vmatprep.subr.mxu0 0.0
      %1400 = vmatpush1.msra.mxu0 0.0
      %1401 = vmatprep.subr.mxu0 0.0
      %1402 = vmatpush1.msra.mxu0 0.0
      %1403 = vmatprep.subr.mxu0 0.0
      %1404 = vmatpush1.msra.mxu0 0.0
      %1405 = vmatprep.subr.mxu0 0.0
      %1406 = vmatpush1.msra.mxu0 0.0
      %1407 = vmatprep.subr.mxu0 0.0
      %1408 = vmatpush1.msra.mxu0 0.0
      %1409 = vmatprep.subr.mxu0 0.0
      %1410 = vmatpush1.msra.mxu0 0.0
      %1411 = vmatprep.subr.mxu0 0.0
      %1412 = vmatpush1.msra.mxu0 0.0
      %1413 = vmatprep.subr.mxu0 0.0
      %1414 = vmatpush1.msra.mxu0 0.0
      %1415 = vmatprep.subr.mxu0 0.0
      %1416 = vmatpush1.msra.mxu0 0.0
      %1417 = vmatprep.subr.mxu0 0.0
      %1418 = vmatpush1.msra.mxu0 0.0
      %1419 = vmatprep.subr.mxu0 0.0
      %1420 = vmatpush1.msra.mxu0 0.0
      %1421 = vmatprep.subr.mxu0 0.0
      %1422 = vmatpush1.msra.mxu0 0.0
      %1423 = vmatprep.subr.mxu0 0.0
      %1424 = vmatpush1.msra.mxu0 0.0
      %1425 = vmatprep.subr.mxu0 0.0
      %1426 = vmatpush1.msra.mxu0 0.0
      %1427 = vmatprep.subr.mxu0 0.0
      %1428 = vmatpush1.msra.mxu0 0.0
      %1429 = vmatprep.subr.mxu0 0.0
      %1430 = vmatpush1.msra.mxu0 0.0
      %1431 = vmatprep.subr.mxu0 0.0
      %1432 = vmatpush1.msra.mxu0 0.0
      %1433 = vmatprep.subr.mxu0 0.0
      %1434 = vmatpush1.msra.mxu0 0.0
      %1435 = vmatprep.subr.mxu0 0.0
      %1436 = vmatpush1.msra.mxu0 0.0
      %1437 = vmatprep.subr.mxu0 0.0
      %1438 = vmatpush1.msra.mxu0 0.0
      %1439 = vmatprep.subr.mxu0 0.0
      %1440 = vmatpush1.msra.mxu0 0.0
      %1441 = vmatprep.subr.mxu0 0.0
      %1442 = vmatpush1.msra.mxu0 0.0
      %1443 = vmatprep.subr.mxu0 0.0
      %1444 = vmatpush1.msra.mxu0 0.0
      %1445 = vmatprep.subr.mxu0 0.0
      %1446 = vmatpush1.msra.mxu0 0.0
      %1447 = vmatprep.subr.mxu0 0.0
      %1448 = vmatpush1.msra.mxu0 0.0
      %1449 = vmatprep.subr.mxu0 0.0
      %1450 = vmatpush1.msra.mxu0 0.0
      %1451 = vmatprep.subr.mxu0 0.0
      %1452 = vmatpush1.msra.mxu0 0.0
      %1453 = vmatprep.subr.mxu0 0.0
      %1454 = vmatpush1.msra.mxu0 0.0
      %1455 = vmatprep.subr.mxu0 0.0
      %1456 = vmatpush1.msra.mxu0 0.0
      %1457 = vmatprep.subr.mxu0 0.0
      %1458 = vmatpush1.msra.mxu0 0.0
      %1459 = vmatprep.mubr.f32.mxu0 0.0
      %1460 = vmatmul.mubr.f32.gmra.mrb[0].mxu0 %v1316
      %v1461 = vpop.f32.mrb[0].mxu0
      %v1462 = vadd.f32 0.0, %v1461
      %v1463 = vpop.f32.mrb[0].mxu0
      %1464 = vdwg.mxu0
      %v1465 = vadd.f32 %v1303, %v1391
      %v1466 = vadd.f32 %v1304, %v1393
      %v1467 = vadd.f32 %v1305, %v1462
      %1468 = vrot.lane.b32.xlu0 %v171, 90
      %v1469 = vpop.permute.xlu0 %1468
      %1470 = vrot.lane.b32.xlu0 %v184, 90
      %v1471 = vpop.permute.xlu0 %1470
      %1472 = vrot.lane.b32.xlu0 %v172, 90
      %v1473 = vpop.permute.xlu0 %1472
      %vm1474 = vcmask 736256
      %v1475 = vsel %vm1474, %v1469, %v1471
      %v1476 = vsel %vm1474, %v1471, %v1473
      %v1478 = vsel %vm194, %v181, 0
      %v1480 = vsel %vm198, %v1475, 0
      %v1482 = vsel %vm198, %v1476, 0
      %v1484 = vsel %vm198, %v1473, 0
      %1486 = vmatprep.subr.mxu0 %v1482
      %1487 = vmatpush1.msra.mxu0 %v1480
      %1488 = vmatprep.subr.mxu0 0.0
      %1489 = vmatpush1.msra.mxu0 0.0
      %1490 = vmatprep.subr.mxu0 0.0
      %1491 = vmatpush1.msra.mxu0 0.0
      %1492 = vmatprep.subr.mxu0 0.0
      %1493 = vmatpush1.msra.mxu0 0.0
      %1494 = vmatprep.subr.mxu0 0.0
      %1495 = vmatpush1.msra.mxu0 0.0
      %1496 = vmatprep.subr.mxu0 0.0
      %1497 = vmatpush1.msra.mxu0 0.0
      %1498 = vmatprep.subr.mxu0 0.0
      %1499 = vmatpush1.msra.mxu0 0.0
      %1500 = vmatprep.subr.mxu0 0.0
      %1501 = vmatpush1.msra.mxu0 0.0
      %1502 = vmatprep.subr.mxu0 0.0
      %1503 = vmatpush1.msra.mxu0 0.0
      %1504 = vmatprep.subr.mxu0 0.0
      %1505 = vmatpush1.msra.mxu0 0.0
      %1506 = vmatprep.subr.mxu0 0.0
      %1507 = vmatpush1.msra.mxu0 0.0
      %1508 = vmatprep.subr.mxu0 0.0
      %1509 = vmatpush1.msra.mxu0 0.0
      %1510 = vmatprep.subr.mxu0 0.0
      %1511 = vmatpush1.msra.mxu0 0.0
      %1512 = vmatprep.subr.mxu0 0.0
      %1513 = vmatpush1.msra.mxu0 0.0
      %1514 = vmatprep.subr.mxu0 0.0
      %1515 = vmatpush1.msra.mxu0 0.0
      %1516 = vmatprep.subr.mxu0 0.0
      %1517 = vmatpush1.msra.mxu0 0.0
      %1518 = vmatprep.subr.mxu0 0.0
      %1519 = vmatpush1.msra.mxu0 0.0
      %1520 = vmatprep.subr.mxu0 0.0
      %1521 = vmatpush1.msra.mxu0 0.0
      %1522 = vmatprep.subr.mxu0 0.0
      %1523 = vmatpush1.msra.mxu0 0.0
      %1524 = vmatprep.subr.mxu0 0.0
      %1525 = vmatpush1.msra.mxu0 0.0
      %1526 = vmatprep.subr.mxu0 0.0
      %1527 = vmatpush1.msra.mxu0 0.0
      %1528 = vmatprep.subr.mxu0 0.0
      %1529 = vmatpush1.msra.mxu0 0.0
      %1530 = vmatprep.subr.mxu0 0.0
      %1531 = vmatpush1.msra.mxu0 0.0
      %1532 = vmatprep.subr.mxu0 0.0
      %1533 = vmatpush1.msra.mxu0 0.0
      %1534 = vmatprep.subr.mxu0 0.0
      %1535 = vmatpush1.msra.mxu0 0.0
      %1536 = vmatprep.subr.mxu0 0.0
      %1537 = vmatpush1.msra.mxu0 0.0
      %1538 = vmatprep.subr.mxu0 0.0
      %1539 = vmatpush1.msra.mxu0 0.0
      %1540 = vmatprep.subr.mxu0 0.0
      %1541 = vmatpush1.msra.mxu0 0.0
      %1542 = vmatprep.subr.mxu0 0.0
      %1543 = vmatpush1.msra.mxu0 0.0
      %1544 = vmatprep.subr.mxu0 0.0
      %1545 = vmatpush1.msra.mxu0 0.0
      %1546 = vmatprep.subr.mxu0 0.0
      %1547 = vmatpush1.msra.mxu0 0.0
      %1548 = vmatprep.subr.mxu0 0.0
      %1549 = vmatpush1.msra.mxu0 0.0
      %1550 = vmatprep.mubr.f32.mxu0 0.0
      %1551 = vmatmul.mubr.f32.gmra.mrb[0].mxu0 %v1478
      %v1552 = vpop.f32.mrb[0].mxu0
      %v1553 = vadd.f32 0.0, %v1552
      %v1554 = vpop.f32.mrb[0].mxu0
      %v1555 = vadd.f32 0.0, %v1554
      %1556 = vdwg.mxu0
      %1557 = vmatprep.subr.mxu0 0.0
      %1558 = vmatpush1.msra.mxu0 %v1484
      %1559 = vmatprep.subr.mxu0 0.0
      %1560 = vmatpush1.msra.mxu0 0.0
      %1561 = vmatprep.subr.mxu0 0.0
      %1562 = vmatpush1.msra.mxu0 0.0
      %1563 = vmatprep.subr.mxu0 0.0
      %1564 = vmatpush1.msra.mxu0 0.0
      %1565 = vmatprep.subr.mxu0 0.0
      %1566 = vmatpush1.msra.mxu0 0.0
      %1567 = vmatprep.subr.mxu0 0.0
      %1568 = vmatpush1.msra.mxu0 0.0
      %1569 = vmatprep.subr.mxu0 0.0
      %1570 = vmatpush1.msra.mxu0 0.0
      %1571 = vmatprep.subr.mxu0 0.0
      %1572 = vmatpush1.msra.mxu0 0.0
      %1573 = vmatprep.subr.mxu0 0.0
      %1574 = vmatpush1.msra.mxu0 0.0
      %1575 = vmatprep.subr.mxu0 0.0
      %1576 = vmatpush1.msra.mxu0 0.0
      %1577 = vmatprep.subr.mxu0 0.0
      %1578 = vmatpush1.msra.mxu0 0.0
      %1579 = vmatprep.subr.mxu0 0.0
      %1580 = vmatpush1.msra.mxu0 0.0
      %1581 = vmatprep.subr.mxu0 0.0
      %1582 = vmatpush1.msra.mxu0 0.0
      %1583 = vmatprep.subr.mxu0 0.0
      %1584 = vmatpush1.msra.mxu0 0.0
      %1585 = vmatprep.subr.mxu0 0.0
      %1586 = vmatpush1.msra.mxu0 0.0
      %1587 = vmatprep.subr.mxu0 0.0
      %1588 = vmatpush1.msra.mxu0 0.0
      %1589 = vmatprep.subr.mxu0 0.0
      %1590 = vmatpush1.msra.mxu0 0.0
      %1591 = vmatprep.subr.mxu0 0.0
      %1592 = vmatpush1.msra.mxu0 0.0
      %1593 = vmatprep.subr.mxu0 0.0
      %1594 = vmatpush1.msra.mxu0 0.0
      %1595 = vmatprep.subr.mxu0 0.0
      %1596 = vmatpush1.msra.mxu0 0.0
      %1597 = vmatprep.subr.mxu0 0.0
      %1598 = vmatpush1.msra.mxu0 0.0
      %1599 = vmatprep.subr.mxu0 0.0
      %1600 = vmatpush1.msra.mxu0 0.0
      %1601 = vmatprep.subr.mxu0 0.0
      %1602 = vmatpush1.msra.mxu0 0.0
      %1603 = vmatprep.subr.mxu0 0.0
      %1604 = vmatpush1.msra.mxu0 0.0
      %1605 = vmatprep.subr.mxu0 0.0
      %1606 = vmatpush1.msra.mxu0 0.0
      %1607 = vmatprep.subr.mxu0 0.0
      %1608 = vmatpush1.msra.mxu0 0.0
      %1609 = vmatprep.subr.mxu0 0.0
      %1610 = vmatpush1.msra.mxu0 0.0
      %1611 = vmatprep.subr.mxu0 0.0
      %1612 = vmatpush1.msra.mxu0 0.0
      %1613 = vmatprep.subr.mxu0 0.0
      %1614 = vmatpush1.msra.mxu0 0.0
      %1615 = vmatprep.subr.mxu0 0.0
      %1616 = vmatpush1.msra.mxu0 0.0
      %1617 = vmatprep.subr.mxu0 0.0
      %1618 = vmatpush1.msra.mxu0 0.0
      %1619 = vmatprep.subr.mxu0 0.0
      %1620 = vmatpush1.msra.mxu0 0.0
      %1621 = vmatprep.mubr.f32.mxu0 0.0
      %1622 = vmatmul.mubr.f32.gmra.mrb[0].mxu0 %v1478
      %v1623 = vpop.f32.mrb[0].mxu0
      %v1624 = vadd.f32 0.0, %v1623
      %v1625 = vpop.f32.mrb[0].mxu0
      %1626 = vdwg.mxu0
      %v1627 = vadd.f32 %v1465, %v1553
      %v1628 = vadd.f32 %v1466, %v1555
      %v1629 = vadd.f32 %v1467, %v1624
      %v1630 = vld [vmem:[%s2] sm:$0xff]
      %1632 = vset.pattern.permute.xlu0 0
      %1633 = vperm.xlu0 %1632, %v1630
      %v1634 = vpop.permute.xlu0 %1633
      %v1636 = vadd.f32 %v1627, %v1634
      %v1637 = vadd.f32 %v1628, %v1634
      %v1638 = vadd.f32 %v1629, %v1634
      %1639 = vst [vmem:[%s170] sm:$0xff] %v1636
      %1640 = vst [vmem:[%s170 + $0x8] sm:$0xff] %v1637
      %vm1641 = vcmask 261120
      %1642 = vst.msk [vmem:[%s170 + $0x10] sm:$0xff] %vm1641, %v1638
      %p1643 = scmp.lt.s32.totalorder %s14, 1
      %s1644 = scalar_select %p1643, %s14, 1
      %s1645 = smul.addr %s1644, 3
      %s1646 = smul.addr %s1645, 8
      %s1647 = scalar_lea.vmem %s3, %s1646
      // Predicated region
      $region33: #{conv2d_forward.1} parent=31 // pred_check
        %p1648 = pneg %p100
      $region34: #{conv2d_forward.1} parent=31 // pred_check_branch
        %1650 = sbr.rel (%p1648) target = $region36
      $region35: #{conv2d_forward.1} parent=31 // pred_region
        _
      $region36: #{conv2d_forward.1} parent=31 // pred_fallthru
        _
    $region32: #{conv2d_forward.1} parent=5 // pred_fallthru
      _
    %p1651 = scmp.le.s32.totalorder 2, %s9
    // Predicated region
    $region37: #{conv2d_forward.1} parent=5 // pred_check
      %p1652 = pneg %p1651
    $region38: #{conv2d_forward.1} parent=5 // pred_check_branch
      %1654 = sbr.rel (%p1652) target = $region40
    $region39: #{conv2d_forward.1} parent=5 // pred_region
      %s1655 = ssub.s32 %s9, 2
      // Predicated region
      $region41: #{conv2d_forward.1} parent=39 // pred_check
        %p1656 = pneg %p106
      $region42: #{conv2d_forward.1} parent=39 // pred_check_branch
        %1658 = sbr.rel (%p1656) target = $region44
      $region43: #{conv2d_forward.1} parent=39 // pred_region
        %p1659 = scmp.lt.s32.totalorder %s15, 1
        %s1660 = scalar_select %p1659, %s15, 1
        %s1661 = smul.addr %s1660, 3
        %s1662 = smul.addr %s1661, 8
        %s1663 = scalar_lea.vmem %s3, %s1662
      $region44: #{conv2d_forward.1} parent=39 // pred_fallthru
        _
    $region40: #{conv2d_forward.1} parent=5 // pred_fallthru
      _
  $region6: #{conv2d_forward.1} parent=0 // loop_footer
    %s13 = sadd.s32 1, %s9
  $region7: #{conv2d_forward.1} parent=0 // loop_footer_branch
    %8 = sbr.rel target = $region3
  $region8: #{conv2d_forward.1} parent=0 // loop_exit
    _

</llo_original>
